<compile_context>
chip_gen: v7x
topology: tpu7x:2x2x1
jax: 0.10.0
libtpu: 0.0.40
codegen_flags: <defaults>
</compile_context>

<pallas_src>
import jax
import jax.numpy as jnp
import numpy as np
from jax.experimental import pallas as pl
from jax.experimental.pallas import tpu as pltpu

NUM_VERTICES = 32
NUM_DIMS = 5
PACK = 128                    # lane width of the packed per-vertex-scalar output
NC = 2                        # grid steps (one per TensorCore on v7x)
VPC = NUM_VERTICES // NC      # vertices processed per grid step (16)


# ----------------------------- Pallas kernel --------------------------------
def _vertex_group_kernel(xw_ref, rv_ref, wb_ref, gs_ref, sc_ref,
                         t_ref, pack_ref):
    """One grid step = VPC (16) hypercube vertices, fully fused.

    xw_ref   : (B, VPC*H)      x tiled VPC times along lanes
    rv_ref   : (2, VPC*H)      row0 = combined ZPE flow, row1 = transform bias
    wb_ref   : (VPC*H, VPC*H)  block-diagonal vertex_transform weights (x @ W)
    gs_ref   : (VPC*H, 128)    col lv = gate weight of vertex lv, col 16+lv = signature
    sc_ref   : (2, 128)        row0 lanes[:16] = gate bias, row1 lanes[:16] = zpe boost
    t_ref    : (B, VPC*H)      transformed, lane-packed (vertex lv at lanes [lv*H, lv*H+H))
    pack_ref : (B, 128)        lanes [0:16)=consciousness, [16:32)=mystical, [32:48)=vertex act
    """
    xw = xw_ref[...]
    zpe = xw * rv_ref[0:1, :]                                  # combined ZPE flows

    # vertex_transform for all 16 vertices: one block-diagonal MXU matmul.
    t = jnp.tanh(
        jnp.dot(zpe, wb_ref[...], preferred_element_type=jnp.float32)
        + rv_ref[1:2, :])
    t_ref[...] = t                                             # lane-dense store

    # Fused gate + signature reductions for all 16 vertices on the MXU.
    # gs columns >= 32 are zero, so lanes [48:128) of pack stay exactly 0.
    pack_ref[...] = jnp.dot(t, gs_ref[...], preferred_element_type=jnp.float32)
    gate = pack_ref[:, 0:VPC]                                  # (B, VPC) gate pre-act
    sigi = pack_ref[:, VPC:2 * VPC]                            # (B, VPC) signature infl.

    c = jax.nn.sigmoid(gate + sc_ref[0:1, 0:VPC])              # consciousness level
    m = jnp.tanh(sigi)                                         # mystical activation
    v = c * (1.0 + 0.5 * m) * sc_ref[1:2, 0:VPC]               # vertex activation

    pack_ref[:, 0:VPC] = c
    pack_ref[:, VPC:2 * VPC] = m
    pack_ref[:, 2 * VPC:3 * VPC] = v


# ---------------------- one-time static weight packing ----------------------
def precompute_packed(params):
    """Lane/block packing of the static per-vertex weights (run once)."""
    w_t = params["w_t"]       # (V, H, H)  x @ W orientation
    b_t = params["b_t"]       # (V, H)
    w_g = params["w_g"]       # (V, H)
    b_g = params["b_g"]       # (V,)
    sig = params["sig"]       # (V, H)
    V, H, _ = w_t.shape
    assert V == NUM_VERTICES and V % NC == 0
    W = VPC * H
    assert W % 128 == 0 and 3 * VPC <= PACK

    # Block-diagonal vertex_transform weights: one (W, W) block-diag per step.
    eye = jnp.eye(VPC, dtype=jnp.float32)
    w_blk = jnp.einsum("ij,cjab->ciajb", eye,
                       w_t.reshape(NC, VPC, H, H)).reshape(NC, W, W)

    # Gate / signature weights as columns lv and VPC+lv of a (W, 128) matrix.
    e_gate = jnp.eye(VPC, PACK, dtype=jnp.float32)
    e_sig = jnp.eye(VPC, PACK, k=VPC, dtype=jnp.float32)
    gs_blk = (jnp.einsum("cva,vn->cvan", w_g.reshape(NC, VPC, H), e_gate)
              + jnp.einsum("cva,vn->cvan", sig.reshape(NC, VPC, H), e_sig)
              ).reshape(NC, W, PACK)

    return {
        "w_blk": w_blk.astype(jnp.float32),          # (NC, W, W)
        "gs_blk": gs_blk.astype(jnp.float32),        # (NC, W, 128)
        "bias_p": b_t.reshape(NC, W).astype(jnp.float32),
        "bg_p": b_g.reshape(NC, VPC).astype(jnp.float32),
    }


# ------------------------------ jitted forward -------------------------------
@jax.jit
def hypercube_forward(params, packed, x):
    """Forward pass of all 32 ZPE-enhanced hypercube vertices (one pallas_call)."""
    flows = params["zpe_flows"]    # (V, 5, S)
    mask = params["coords_mask"]   # (V, 5) bool
    w_mod = params["w_mod"]        # (V, 5, H)
    b_mod = params["b_mod"]        # (V, 5)

    w_blk = packed["w_blk"]        # (NC, W, W)
    gs_blk = packed["gs_blk"]      # (NC, W, 128)
    bias_p = packed["bias_p"]      # (NC, W)
    bg_p = packed["bg_p"]          # (NC, VPC)

    V = NUM_VERTICES
    W = w_blk.shape[1]
    H = W // VPC
    B = x.shape[0]
    S = flows.shape[-1]
    x = x.astype(jnp.float32)

    # ---- perturb_zpe_flows -------------------------------------------------
    # TODO(synk): PyTorch mutates the zpe_flow Parameters in place; here the
    # updated flows are returned as new functional state.
    batch_mean = jnp.mean(x, axis=0)
    zpe_mod = jax.nn.sigmoid(jnp.einsum("vkh,h->vk", w_mod, batch_mean) + b_mod)
    pert = jnp.tanh(zpe_mod * 0.3)
    flows = jnp.clip(0.9 * flows + 0.1 * (1.0 + 0.2 * pert)[..., None], 0.1, 2.0)

    # ---- combined ZPE flow over active dimensions + zpe boost ---------------
    reps = H // S + 1
    flow_exp = jnp.tile(flows, (1, 1, reps))[:, :, :H]                        # (V,5,H)
    combined = jnp.prod(jnp.where(mask[:, :, None], flow_exp, 1.0), axis=1)   # (V,H)
    boost = jnp.mean(flows, axis=(1, 2))                                      # (V,)

    # ---- lane-packed kernel operands (tiny; fused under this jit) -----------
    x_wide = jnp.tile(x, (1, VPC))                                            # (B, W)
    rowvec = jnp.stack([combined.reshape(NC, W), bias_p], axis=1)             # (NC,2,W)
    sc = jnp.zeros((NC, 2, PACK), jnp.float32)
    sc = sc.at[:, 0, :VPC].set(bg_p)
    sc = sc.at[:, 1, :VPC].set(boost.reshape(NC, VPC))

    grid_spec = pltpu.PrefetchScalarGridSpec(
        num_scalar_prefetch=0,
        grid=(NC,),
        in_specs=[
            pl.BlockSpec((B, W), lambda c: (0, 0)),              # x_wide (shared)
            pl.BlockSpec((None, 2, W), lambda c: (c, 0, 0)),     # [combined | bias]
            pl.BlockSpec((None, W, W), lambda c: (c, 0, 0)),     # block-diag w_t
            pl.BlockSpec((None, W, PACK), lambda c: (c, 0, 0)),  # [gate | sig] cols
            pl.BlockSpec((None, 2, PACK), lambda c: (c, 0, 0)),  # [gate bias | boost]
        ],
        out_specs=(
            pl.BlockSpec((None, B, W), lambda c: (c, 0, 0)),     # transformed (packed)
            pl.BlockSpec((None, B, PACK), lambda c: (c, 0, 0)),  # per-vertex scalars
        ),
    )
    out_shape = (
        jax.ShapeDtypeStruct((NC, B, W), jnp.float32),
        jax.ShapeDtypeStruct((NC, B, PACK), jnp.float32),
    )

    t_pack, s_pack = pl.pallas_call(
        _vertex_group_kernel,
        grid_spec=grid_spec,
        out_shape=out_shape,
        compiler_params=pltpu.CompilerParams(
            dimension_semantics=("parallel",)),
    )(x_wide, rowvec, w_blk, gs_blk, sc)

    # ---- un-pack the lane-dense outputs -------------------------------------
    transformed = (t_pack.reshape(NC, B, VPC, H)
                   .transpose(0, 2, 1, 3).reshape(V, B, H))

    def _unpack(lo):
        return s_pack[:, :, lo:lo + VPC].transpose(0, 2, 1).reshape(V, B)[..., None]

    c = _unpack(0)
    m = _unpack(VPC)
    vact = _unpack(2 * VPC)

    outputs = {
        "transformed": transformed,               # (V, B, H)
        "consciousness_level": c,                 # (V, B, 1)
        "mystical_activation": m,                 # (V, B, 1)
        "vertex_activation": vact,                # (V, B, 1)
        "zpe_flows": flows,                       # (V, 5, S) updated state
        "zpe_boost": boost,                       # (V,)
    }
    return outputs, flows


# -------------------------- parameter construction --------------------------
def init_hypercube_params(key, hidden_dim, sequence_length):
    V, D = NUM_VERTICES, NUM_DIMS
    coords = np.array([[int(b) for b in format(v, "05b")] for v in range(V)],
                      dtype=np.float32)                                    # (V,5)
    cstrength = coords.sum(axis=1) / 5.0                                   # (V,)

    ks = jax.random.split(key, 7)
    lim = 1.0 / float(np.sqrt(hidden_dim))
    # w_t is stored in x @ W orientation (in_features, out_features).
    w_t = jax.random.uniform(ks[0], (V, hidden_dim, hidden_dim), jnp.float32, -lim, lim)
    b_t = jax.random.uniform(ks[1], (V, hidden_dim), jnp.float32, -lim, lim)
    w_g = jax.random.uniform(ks[2], (V, hidden_dim), jnp.float32, -lim, lim)
    b_g = jax.random.uniform(ks[3], (V,), jnp.float32, -lim, lim)
    w_mod = jax.random.uniform(ks[4], (V, D, hidden_dim), jnp.float32, -lim, lim)
    b_mod = jax.random.uniform(ks[5], (V, D), jnp.float32, -lim, lim)
    sig = jax.random.normal(ks[6], (V, hidden_dim), jnp.float32) * 0.01

    # _initialize_vertex_properties (vectorized over vertices)
    cs = jnp.asarray(cstrength)
    w_t = w_t * (0.5 + cs)[:, None, None]
    sig = sig * cs[:, None]
    flows = jnp.broadcast_to((0.8 + 0.4 * jnp.asarray(coords))[:, :, None],
                             (V, D, sequence_length)).astype(jnp.float32)

    # vertex 0: void state; vertex 31: full transcendence
    sig = sig.at[0].set(0.0)
    flows = flows.at[0].set(0.1)
    sig = sig.at[V - 1].multiply(2.0)
    flows = flows.at[V - 1].set(1.5)

    return {
        "coords_mask": jnp.asarray(coords > 0.5),  # (V,5) bool
        "w_t": w_t, "b_t": b_t,                    # vertex_transform
        "w_g": w_g, "b_g": b_g,                    # consciousness_gate
        "w_mod": w_mod, "b_mod": b_mod,            # zpe_modulator
        "sig": sig,                                # mystical_signature
        "zpe_flows": flows,                        # (V,5,seq)
    }


# ---------------------- pure-JAX per-vertex reference ------------------------
def vertex_forward_ref(params, vertex_index, x):
    """Follows the PyTorch module's forward for a single vertex."""
    H = x.shape[1]
    coords = [int(b) for b in format(vertex_index, "05b")]
    w_t = params["w_t"][vertex_index]
    b_t = params["b_t"][vertex_index]
    w_g = params["w_g"][vertex_index]
    b_g = params["b_g"][vertex_index]
    w_mod = params["w_mod"][vertex_index]
    b_mod = params["b_mod"][vertex_index]
    sig = params["sig"][vertex_index]
    flows = params["zpe_flows"][vertex_index]
    S = flows.shape[-1]

    batch_mean = jnp.mean(x, axis=0)
    zpe_mod = jax.nn.sigmoid(w_mod @ batch_mean + b_mod)
    pert = jnp.tanh(zpe_mod * 0.3)
    flows = jnp.clip(0.9 * flows + 0.1 * (1.0 + 0.2 * pert)[:, None], 0.1, 2.0)

    reps = H // S + 1
    combined = jnp.ones(H, jnp.float32)
    for i, bit in enumerate(coords):
        if bit == 1:
            combined = combined * jnp.tile(flows[i], reps)[:H]

    zpe = x * combined[None, :]
    t = jnp.tanh(zpe @ w_t + b_t)
    c = jax.nn.sigmoid(t @ w_g[:, None] + b_g)
    m = jnp.tanh(jnp.sum(t * sig[None, :], axis=-1, keepdims=True))
    boost = jnp.mean(flows)
    v = c * (1.0 + 0.5 * m) * boost
    return t, c, m, v, flows


# ---------------------------------- main -------------------------------------
if __name__ == "__main__":
    HIDDEN = 32
    BATCH = 8
    SEQ = 10

    key = jax.random.PRNGKey(0)
    pkey, xkey = jax.random.split(key)
    params = init_hypercube_params(pkey, HIDDEN, SEQ)
    packed = precompute_packed(params)
    x = jax.random.normal(xkey, (BATCH, HIDDEN), jnp.float32)

    out, new_flows = hypercube_forward(params, packed, x)
    jax.block_until_ready(out["vertex_activation"])

    # sanity check a few vertices (incl. the special ones) against the reference
    for v_idx in (0, 13, 31):
        t_r, c_r, m_r, v_r, f_r = vertex_forward_ref(params, v_idx, x)
        np.testing.assert_allclose(np.asarray(out["transformed"][v_idx]),
                                   np.asarray(t_r), rtol=1e-3, atol=1e-3)
        np.testing.assert_allclose(np.asarray(out["consciousness_level"][v_idx]),
                                   np.asarray(c_r), rtol=1e-3, atol=1e-3)
        np.testing.assert_allclose(np.asarray(out["mystical_activation"][v_idx]),
                                   np.asarray(m_r), rtol=1e-3, atol=1e-3)
        np.testing.assert_allclose(np.asarray(out["vertex_activation"][v_idx]),
                                   np.asarray(v_r), rtol=1e-3, atol=1e-3)
        np.testing.assert_allclose(np.asarray(new_flows[v_idx]),
                                   np.asarray(f_r), rtol=1e-5, atol=1e-5)

    print("KERNEL_OK")
</pallas_src>

<mosaic_0001>
module attributes {stable_mosaic.version = 11 : i64} {
  func.func @_vertex_group_kernel(%arg0: i32, %arg1: memref<8x512xf32, #tpu.memory_space<vmem>>, %arg2: memref<1x2x512xf32, #tpu.memory_space<vmem>>, %arg3: memref<1x512x512xf32, #tpu.memory_space<vmem>>, %arg4: memref<1x512x128xf32, #tpu.memory_space<vmem>>, %arg5: memref<1x2x128xf32, #tpu.memory_space<vmem>>, %arg6: memref<1x8x512xf32, #tpu.memory_space<vmem>>, %arg7: memref<1x8x128xf32, #tpu.memory_space<vmem>>) attributes {dimension_semantics = [#tpu.dimension_semantics<parallel>], iteration_bounds = array<i64: 2>, scalar_prefetch = 0 : i64, scratch_operands = 0 : i64, tpu.core_type = #tpu.core_type<tc>, window_params = [{pipeline_mode = #tpu.pipeline_mode<synchronous>, transform_indices = @transform_0, window_bounds = array<i64: 8, 512>}, {transform_indices = @transform_1, window_bounds = array<i64: 1, 2, 512>}, {transform_indices = @transform_2, window_bounds = array<i64: 1, 512, 512>}, {transform_indices = @transform_3, window_bounds = array<i64: 1, 512, 128>}, {transform_indices = @transform_4, window_bounds = array<i64: 1, 2, 128>}, {transform_indices = @transform_5, window_bounds = array<i64: 1, 8, 512>}, {transform_indices = @transform_6, window_bounds = array<i64: 1, 8, 128>}]} {
    %c0 = arith.constant 0 : index
    %c0_0 = arith.constant 0 : index
    %0 = vector.load %arg1[%c0, %c0_0] : memref<8x512xf32, #tpu.memory_space<vmem>>, vector<8x512xf32>
    %c0_1 = arith.constant 0 : index
    %c0_2 = arith.constant 0 : index
    %c0_3 = arith.constant 0 : index
    %1 = vector.load %arg2[%c0_1, %c0_2, %c0_3] : memref<1x2x512xf32, #tpu.memory_space<vmem>>, vector<1x1x512xf32>
    %2 = vector.shape_cast %1 : vector<1x1x512xf32> to vector<1x512xf32>
    %3 = vector.broadcast %2 : vector<1x512xf32> to vector<8x512xf32>
    %4 = arith.mulf %0, %3 : vector<8x512xf32>
    %c0_4 = arith.constant 0 : index
    %c0_5 = arith.constant 0 : index
    %c0_6 = arith.constant 0 : index
    %5 = vector.load %arg3[%c0_4, %c0_5, %c0_6] : memref<1x512x512xf32, #tpu.memory_space<vmem>>, vector<1x512x512xf32>
    %6 = vector.shape_cast %5 : vector<1x512x512xf32> to vector<512x512xf32>
    %cst = arith.constant dense<0.000000e+00> : vector<8x512xf32>
    %7 = tpu.matmul %4, %6, %cst {dimension_numbers = #tpu.dot_dimension_numbers<[1], [0], [0], [1], [0, 0, 1, 1], [], []>} : vector<8x512xf32>, vector<512x512xf32>, vector<8x512xf32> -> vector<8x512xf32>
    %c0_7 = arith.constant 0 : index
    %c1 = arith.constant 1 : index
    %c0_8 = arith.constant 0 : index
    %8 = vector.load %arg2[%c0_7, %c1, %c0_8] : memref<1x2x512xf32, #tpu.memory_space<vmem>>, vector<1x1x512xf32>
    %9 = vector.shape_cast %8 : vector<1x1x512xf32> to vector<1x512xf32>
    %10 = vector.broadcast %9 : vector<1x512xf32> to vector<8x512xf32>
    %11 = arith.addf %7, %10 : vector<8x512xf32>
    %12 = math.tanh %11 : vector<8x512xf32>
    %c0_9 = arith.constant 0 : index
    %c0_10 = arith.constant 0 : index
    %c0_11 = arith.constant 0 : index
    %13 = vector.load %arg6[%c0_9, %c0_10, %c0_11] : memref<1x8x512xf32, #tpu.memory_space<vmem>>, vector<1x8x512xf32>
    %14 = vector.shape_cast %13 : vector<1x8x512xf32> to vector<8x512xf32>
    %15 = vector.shape_cast %12 : vector<8x512xf32> to vector<1x8x512xf32>
    tpu.vector_store %arg6[%c0_9, %c0_10, %c0_11], %15 {strides = array<i32>} : memref<1x8x512xf32, #tpu.memory_space<vmem>>, vector<1x8x512xf32>,
    %c0_12 = arith.constant 0 : index
    %c0_13 = arith.constant 0 : index
    %c0_14 = arith.constant 0 : index
    %16 = vector.load %arg4[%c0_12, %c0_13, %c0_14] : memref<1x512x128xf32, #tpu.memory_space<vmem>>, vector<1x512x128xf32>
    %17 = vector.shape_cast %16 : vector<1x512x128xf32> to vector<512x128xf32>
    %cst_15 = arith.constant dense<0.000000e+00> : vector<8x128xf32>
    %18 = tpu.matmul %12, %17, %cst_15 {dimension_numbers = #tpu.dot_dimension_numbers<[1], [0], [0], [1], [0, 0, 1, 1], [], []>} : vector<8x512xf32>, vector<512x128xf32>, vector<8x128xf32> -> vector<8x128xf32>
    %c0_16 = arith.constant 0 : index
    %c0_17 = arith.constant 0 : index
    %c0_18 = arith.constant 0 : index
    %19 = vector.load %arg7[%c0_16, %c0_17, %c0_18] : memref<1x8x128xf32, #tpu.memory_space<vmem>>, vector<1x8x128xf32>
    %20 = vector.shape_cast %19 : vector<1x8x128xf32> to vector<8x128xf32>
    %21 = vector.shape_cast %18 : vector<8x128xf32> to vector<1x8x128xf32>
    tpu.vector_store %arg7[%c0_16, %c0_17, %c0_18], %21 {strides = array<i32>} : memref<1x8x128xf32, #tpu.memory_space<vmem>>, vector<1x8x128xf32>,
    %c0_19 = arith.constant 0 : index
    %c0_20 = arith.constant 0 : index
    %c0_21 = arith.constant 0 : index
    %22 = vector.load %arg7[%c0_19, %c0_20, %c0_21] : memref<1x8x128xf32, #tpu.memory_space<vmem>>, vector<1x8x16xf32>
    %23 = vector.shape_cast %22 : vector<1x8x16xf32> to vector<8x16xf32>
    %c0_22 = arith.constant 0 : index
    %c0_23 = arith.constant 0 : index
    %c16 = arith.constant 16 : index
    %24 = vector.load %arg7[%c0_22, %c0_23, %c16] : memref<1x8x128xf32, #tpu.memory_space<vmem>>, vector<1x8x16xf32>
    %25 = vector.shape_cast %24 : vector<1x8x16xf32> to vector<8x16xf32>
    %c0_24 = arith.constant 0 : index
    %c0_25 = arith.constant 0 : index
    %c0_26 = arith.constant 0 : index
    %26 = vector.load %arg5[%c0_24, %c0_25, %c0_26] : memref<1x2x128xf32, #tpu.memory_space<vmem>>, vector<1x1x16xf32>
    %27 = vector.shape_cast %26 : vector<1x1x16xf32> to vector<1x16xf32>
    %28 = vector.broadcast %27 : vector<1x16xf32> to vector<8x16xf32>
    %29 = arith.addf %23, %28 : vector<8x16xf32>
    %30 = arith.negf %29 : vector<8x16xf32>
    %31 = math.exp %30 : vector<8x16xf32>
    %cst_27 = arith.constant 1.000000e+00 : f32
    %32 = vector.broadcast %cst_27 : f32 to vector<8x16xf32>
    %33 = arith.addf %32, %31 : vector<8x16xf32>
    %34 = arith.divf %32, %33 : vector<8x16xf32>
    %35 = math.tanh %25 : vector<8x16xf32>
    %cst_28 = arith.constant 5.000000e-01 : f32
    %36 = vector.broadcast %cst_28 : f32 to vector<8x16xf32>
    %37 = arith.mulf %36, %35 : vector<8x16xf32>
    %cst_29 = arith.constant 1.000000e+00 : f32
    %38 = vector.broadcast %cst_29 : f32 to vector<8x16xf32>
    %39 = arith.addf %38, %37 : vector<8x16xf32>
    %40 = arith.mulf %34, %39 : vector<8x16xf32>
    %c0_30 = arith.constant 0 : index
    %c1_31 = arith.constant 1 : index
    %c0_32 = arith.constant 0 : index
    %41 = vector.load %arg5[%c0_30, %c1_31, %c0_32] : memref<1x2x128xf32, #tpu.memory_space<vmem>>, vector<1x1x16xf32>
    %42 = vector.shape_cast %41 : vector<1x1x16xf32> to vector<1x16xf32>
    %43 = vector.broadcast %42 : vector<1x16xf32> to vector<8x16xf32>
    %44 = arith.mulf %40, %43 : vector<8x16xf32>
    %c0_33 = arith.constant 0 : index
    %c0_34 = arith.constant 0 : index
    %c0_35 = arith.constant 0 : index
    %45 = vector.load %arg7[%c0_33, %c0_34, %c0_35] : memref<1x8x128xf32, #tpu.memory_space<vmem>>, vector<1x8x16xf32>
    %46 = vector.shape_cast %45 : vector<1x8x16xf32> to vector<8x16xf32>
    %47 = vector.shape_cast %34 : vector<8x16xf32> to vector<1x8x16xf32>
    tpu.vector_store %arg7[%c0_33, %c0_34, %c0_35], %47 {strides = array<i32>} : memref<1x8x128xf32, #tpu.memory_space<vmem>>, vector<1x8x16xf32>,
    %c0_36 = arith.constant 0 : index
    %c0_37 = arith.constant 0 : index
    %c16_38 = arith.constant 16 : index
    %48 = vector.load %arg7[%c0_36, %c0_37, %c16_38] : memref<1x8x128xf32, #tpu.memory_space<vmem>>, vector<1x8x16xf32>
    %49 = vector.shape_cast %48 : vector<1x8x16xf32> to vector<8x16xf32>
    %50 = vector.shape_cast %35 : vector<8x16xf32> to vector<1x8x16xf32>
    tpu.vector_store %arg7[%c0_36, %c0_37, %c16_38], %50 {strides = array<i32>} : memref<1x8x128xf32, #tpu.memory_space<vmem>>, vector<1x8x16xf32>,
    %c0_39 = arith.constant 0 : index
    %c0_40 = arith.constant 0 : index
    %c32 = arith.constant 32 : index
    %51 = vector.load %arg7[%c0_39, %c0_40, %c32] : memref<1x8x128xf32, #tpu.memory_space<vmem>>, vector<1x8x16xf32>
    %52 = vector.shape_cast %51 : vector<1x8x16xf32> to vector<8x16xf32>
    %53 = vector.shape_cast %44 : vector<8x16xf32> to vector<1x8x16xf32>
    tpu.vector_store %arg7[%c0_39, %c0_40, %c32], %53 {strides = array<i32>} : memref<1x8x128xf32, #tpu.memory_space<vmem>>, vector<1x8x16xf32>,
    return
  }
  func.func @transform_0(%arg0: i32) -> (i32, i32) {
    %c0_i32 = arith.constant 0 : i32
    %c0_i32_0 = arith.constant 0 : i32
    %c0_i32_1 = arith.constant 0 : i32
    return %c0_i32, %c0_i32_0 : i32, i32
  }
  func.func @transform_1(%arg0: i32) -> (i32, i32, i32) {
    %c0_i32 = arith.constant 0 : i32
    %c0_i32_0 = arith.constant 0 : i32
    %c0_i32_1 = arith.constant 0 : i32
    return %arg0, %c0_i32, %c0_i32_0 : i32, i32, i32
  }
  func.func @transform_2(%arg0: i32) -> (i32, i32, i32) {
    %c0_i32 = arith.constant 0 : i32
    %c0_i32_0 = arith.constant 0 : i32
    %c0_i32_1 = arith.constant 0 : i32
    return %arg0, %c0_i32, %c0_i32_0 : i32, i32, i32
  }
  func.func @transform_3(%arg0: i32) -> (i32, i32, i32) {
    %c0_i32 = arith.constant 0 : i32
    %c0_i32_0 = arith.constant 0 : i32
    %c0_i32_1 = arith.constant 0 : i32
    return %arg0, %c0_i32, %c0_i32_0 : i32, i32, i32
  }
  func.func @transform_4(%arg0: i32) -> (i32, i32, i32) {
    %c0_i32 = arith.constant 0 : i32
    %c0_i32_0 = arith.constant 0 : i32
    %c0_i32_1 = arith.constant 0 : i32
    return %arg0, %c0_i32, %c0_i32_0 : i32, i32, i32
  }
  func.func @transform_5(%arg0: i32) -> (i32, i32, i32) {
    %c0_i32 = arith.constant 0 : i32
    %c0_i32_0 = arith.constant 0 : i32
    %c0_i32_1 = arith.constant 0 : i32
    return %arg0, %c0_i32, %c0_i32_0 : i32, i32, i32
  }
  func.func @transform_6(%arg0: i32) -> (i32, i32, i32) {
    %c0_i32 = arith.constant 0 : i32
    %c0_i32_0 = arith.constant 0 : i32
    %c0_i32_1 = arith.constant 0 : i32
    return %arg0, %c0_i32, %c0_i32_0 : i32, i32, i32
  }
}

</mosaic_0001>

<llo_original>
// kernel: tile.14
$region0: #{tile.14}
  %s0 = inlined_call_operand.vmem [shape: f32[32,5,4,10], index: 0, kind: input, shape index: {}]
  %s1 = inlined_call_operand.vmem [shape: f32[32,5,40], index: 1, kind: output, shape index: {}]
  %v2 = vld [vmem:[%s0] sm:$0xff]
  %vm3 = vcmask 261120
  %4 = vst.msk [vmem:[%s1] sm:$0xff] %vm3, %v2
  %s5 = scalar_lea.vmem %s0, 8
  %v6 = vld [vmem:[%s5] sm:$0x3]
  %vm7 = vcmask 261120
  %s8 = scalar_lea.vmem %s1, 8
  %9 = vst.msk [vmem:[%s8] sm:$0x3] %vm7, %v6
  %s10 = scalar_lea.vmem %s0, 16
  %v11 = vld [vmem:[%s10] sm:$0xff]
  %vm12 = vcmask 261120
  %s13 = scalar_lea.vmem %s1, 10
  %14 = vst.msk [vmem:[%s13] sm:$0xff] %vm12, %v11
  %s15 = scalar_lea.vmem %s0, 24
  %v16 = vld [vmem:[%s15] sm:$0x3]
  %vm17 = vcmask 261120
  %s18 = scalar_lea.vmem %s1, 18
  %19 = vst.msk [vmem:[%s18] sm:$0x3] %vm17, %v16
  %s20 = scalar_lea.vmem %s0, 32
  %v21 = vld [vmem:[%s20] sm:$0xff]
  %vm22 = vcmask 261120
  %s23 = scalar_lea.vmem %s1, 20
  %24 = vst.msk [vmem:[%s23] sm:$0xff] %vm22, %v21
  %s25 = scalar_lea.vmem %s0, 40
  %v26 = vld [vmem:[%s25] sm:$0x3]
  %vm27 = vcmask 261120
  %s28 = scalar_lea.vmem %s1, 28
  %29 = vst.msk [vmem:[%s28] sm:$0x3] %vm27, %v26
  %s30 = scalar_lea.vmem %s0, 48
  %v31 = vld [vmem:[%s30] sm:$0xff]
  %vm32 = vcmask 261120
  %s33 = scalar_lea.vmem %s1, 30
  %34 = vst.msk [vmem:[%s33] sm:$0xff] %vm32, %v31
  %s35 = scalar_lea.vmem %s0, 56
  %v36 = vld [vmem:[%s35] sm:$0x3]
  %vm37 = vcmask 261120
  %s38 = scalar_lea.vmem %s1, 38
  %39 = vst.msk [vmem:[%s38] sm:$0x3] %vm37, %v36
  %s40 = scalar_lea.vmem %s0, 64
  %v41 = vld [vmem:[%s40] sm:$0xff]
  %vm42 = vcmask 261120
  %s43 = scalar_lea.vmem %s1, 40
  %44 = vst.msk [vmem:[%s43] sm:$0xff] %vm42, %v41
  %s45 = scalar_lea.vmem %s0, 72
  %v46 = vld [vmem:[%s45] sm:$0x3]
  %vm47 = vcmask 261120
  %s48 = scalar_lea.vmem %s1, 48
  %49 = vst.msk [vmem:[%s48] sm:$0x3] %vm47, %v46
  %s50 = scalar_lea.vmem %s0, 80
  %v51 = vld [vmem:[%s50] sm:$0xff]
  %vm52 = vcmask 261120
  %s53 = scalar_lea.vmem %s1, 50
  %54 = vst.msk [vmem:[%s53] sm:$0xff] %vm52, %v51
  %s55 = scalar_lea.vmem %s0, 88
  %v56 = vld [vmem:[%s55] sm:$0x3]
  %vm57 = vcmask 261120
  %s58 = scalar_lea.vmem %s1, 58
  %59 = vst.msk [vmem:[%s58] sm:$0x3] %vm57, %v56
  %s60 = scalar_lea.vmem %s0, 96
  %v61 = vld [vmem:[%s60] sm:$0xff]
  %vm62 = vcmask 261120
  %s63 = scalar_lea.vmem %s1, 60
  %64 = vst.msk [vmem:[%s63] sm:$0xff] %vm62, %v61
  %s65 = scalar_lea.vmem %s0, 104
  %v66 = vld [vmem:[%s65] sm:$0x3]
  %vm67 = vcmask 261120
  %s68 = scalar_lea.vmem %s1, 68
  %69 = vst.msk [vmem:[%s68] sm:$0x3] %vm67, %v66
  %s70 = scalar_lea.vmem %s0, 112
  %v71 = vld [vmem:[%s70] sm:$0xff]
  %vm72 = vcmask 261120
  %s73 = scalar_lea.vmem %s1, 70
  %74 = vst.msk [vmem:[%s73] sm:$0xff] %vm72, %v71
  %s75 = scalar_lea.vmem %s0, 120
  %v76 = vld [vmem:[%s75] sm:$0x3]
  %vm77 = vcmask 261120
  %s78 = scalar_lea.vmem %s1, 78
  %79 = vst.msk [vmem:[%s78] sm:$0x3] %vm77, %v76
  %s80 = scalar_lea.vmem %s0, 128
  %v81 = vld [vmem:[%s80] sm:$0xff]
  %vm82 = vcmask 261120
  %s83 = scalar_lea.vmem %s1, 80
  %84 = vst.msk [vmem:[%s83] sm:$0xff] %vm82, %v81
  %s85 = scalar_lea.vmem %s0, 136
  %v86 = vld [vmem:[%s85] sm:$0x3]
  %vm87 = vcmask 261120
  %s88 = scalar_lea.vmem %s1, 88
  %89 = vst.msk [vmem:[%s88] sm:$0x3] %vm87, %v86
  %s90 = scalar_lea.vmem %s0, 144
  %v91 = vld [vmem:[%s90] sm:$0xff]
  %vm92 = vcmask 261120
  %s93 = scalar_lea.vmem %s1, 90
  %94 = vst.msk [vmem:[%s93] sm:$0xff] %vm92, %v91
  %s95 = scalar_lea.vmem %s0, 152
  %v96 = vld [vmem:[%s95] sm:$0x3]
  %vm97 = vcmask 261120
  %s98 = scalar_lea.vmem %s1, 98
  %99 = vst.msk [vmem:[%s98] sm:$0x3] %vm97, %v96
  %s100 = scalar_lea.vmem %s0, 160
  %v101 = vld [vmem:[%s100] sm:$0xff]
  %vm102 = vcmask 261120
  %s103 = scalar_lea.vmem %s1, 100
  %104 = vst.msk [vmem:[%s103] sm:$0xff] %vm102, %v101
  %s105 = scalar_lea.vmem %s0, 168
  %v106 = vld [vmem:[%s105] sm:$0x3]
  %vm107 = vcmask 261120
  %s108 = scalar_lea.vmem %s1, 108
  %109 = vst.msk [vmem:[%s108] sm:$0x3] %vm107, %v106
  %s110 = scalar_lea.vmem %s0, 176
  %v111 = vld [vmem:[%s110] sm:$0xff]
  %vm112 = vcmask 261120
  %s113 = scalar_lea.vmem %s1, 110
  %114 = vst.msk [vmem:[%s113] sm:$0xff] %vm112, %v111
  %s115 = scalar_lea.vmem %s0, 184
  %v116 = vld [vmem:[%s115] sm:$0x3]
  %vm117 = vcmask 261120
  %s118 = scalar_lea.vmem %s1, 118
  %119 = vst.msk [vmem:[%s118] sm:$0x3] %vm117, %v116
  %s120 = scalar_lea.vmem %s0, 192
  %v121 = vld [vmem:[%s120] sm:$0xff]
  %vm122 = vcmask 261120
  %s123 = scalar_lea.vmem %s1, 120
  %124 = vst.msk [vmem:[%s123] sm:$0xff] %vm122, %v121
  %s125 = scalar_lea.vmem %s0, 200
  %v126 = vld [vmem:[%s125] sm:$0x3]
  %vm127 = vcmask 261120
  %s128 = scalar_lea.vmem %s1, 128
  %129 = vst.msk [vmem:[%s128] sm:$0x3] %vm127, %v126
  %s130 = scalar_lea.vmem %s0, 208
  %v131 = vld [vmem:[%s130] sm:$0xff]
  %vm132 = vcmask 261120
  %s133 = scalar_lea.vmem %s1, 130
  %134 = vst.msk [vmem:[%s133] sm:$0xff] %vm132, %v131
  %s135 = scalar_lea.vmem %s0, 216
  %v136 = vld [vmem:[%s135] sm:$0x3]
  %vm137 = vcmask 261120
  %s138 = scalar_lea.vmem %s1, 138
  %139 = vst.msk [vmem:[%s138] sm:$0x3] %vm137, %v136
  %s140 = scalar_lea.vmem %s0, 224
  %v141 = vld [vmem:[%s140] sm:$0xff]
  %vm142 = vcmask 261120
  %s143 = scalar_lea.vmem %s1, 140
  %144 = vst.msk [vmem:[%s143] sm:$0xff] %vm142, %v141
  %s145 = scalar_lea.vmem %s0, 232
  %v146 = vld [vmem:[%s145] sm:$0x3]
  %vm147 = vcmask 261120
  %s148 = scalar_lea.vmem %s1, 148
  %149 = vst.msk [vmem:[%s148] sm:$0x3] %vm147, %v146
  %s150 = scalar_lea.vmem %s0, 240
  %v151 = vld [vmem:[%s150] sm:$0xff]
  %vm152 = vcmask 261120
  %s153 = scalar_lea.vmem %s1, 150
  %154 = vst.msk [vmem:[%s153] sm:$0xff] %vm152, %v151
  %s155 = scalar_lea.vmem %s0, 248
  %v156 = vld [vmem:[%s155] sm:$0x3]
  %vm157 = vcmask 261120
  %s158 = scalar_lea.vmem %s1, 158
  %159 = vst.msk [vmem:[%s158] sm:$0x3] %vm157, %v156
  %s160 = scalar_lea.vmem %s0, 256
  %v161 = vld [vmem:[%s160] sm:$0xff]
  %vm162 = vcmask 261120
  %s163 = scalar_lea.vmem %s1, 160
  %164 = vst.msk [vmem:[%s163] sm:$0xff] %vm162, %v161
  %s165 = scalar_lea.vmem %s0, 264
  %v166 = vld [vmem:[%s165] sm:$0x3]
  %vm167 = vcmask 261120
  %s168 = scalar_lea.vmem %s1, 168
  %169 = vst.msk [vmem:[%s168] sm:$0x3] %vm167, %v166
  %s170 = scalar_lea.vmem %s0, 272
  %v171 = vld [vmem:[%s170] sm:$0xff]
  %vm172 = vcmask 261120
  %s173 = scalar_lea.vmem %s1, 170
  %174 = vst.msk [vmem:[%s173] sm:$0xff] %vm172, %v171
  %s175 = scalar_lea.vmem %s0, 280
  %v176 = vld [vmem:[%s175] sm:$0x3]
  %vm177 = vcmask 261120
  %s178 = scalar_lea.vmem %s1, 178
  %179 = vst.msk [vmem:[%s178] sm:$0x3] %vm177, %v176
  %s180 = scalar_lea.vmem %s0, 288
  %v181 = vld [vmem:[%s180] sm:$0xff]
  %vm182 = vcmask 261120
  %s183 = scalar_lea.vmem %s1, 180
  %184 = vst.msk [vmem:[%s183] sm:$0xff] %vm182, %v181
  %s185 = scalar_lea.vmem %s0, 296
  %v186 = vld [vmem:[%s185] sm:$0x3]
  %vm187 = vcmask 261120
  %s188 = scalar_lea.vmem %s1, 188
  %189 = vst.msk [vmem:[%s188] sm:$0x3] %vm187, %v186
  %s190 = scalar_lea.vmem %s0, 304
  %v191 = vld [vmem:[%s190] sm:$0xff]
  %vm192 = vcmask 261120
  %s193 = scalar_lea.vmem %s1, 190
  %194 = vst.msk [vmem:[%s193] sm:$0xff] %vm192, %v191
  %s195 = scalar_lea.vmem %s0, 312
  %v196 = vld [vmem:[%s195] sm:$0x3]
  %vm197 = vcmask 261120
  %s198 = scalar_lea.vmem %s1, 198
  %199 = vst.msk [vmem:[%s198] sm:$0x3] %vm197, %v196

// kernel: tile.19
$region0: #{tile.19}
  %s0 = inlined_call_operand.vmem [shape: f32[8,16,32], index: 0, kind: input, shape index: {}]
  %s1 = inlined_call_operand.vmem [shape: f32[8,512], index: 1, kind: output, shape index: {}]
  %v2 = vld [vmem:[%s0] ss:$4 sm:$0xff]
  %vm3 = vcmask 261120
  %4 = vst.msk [vmem:[%s1] ss:$8 sm:$0xf] %vm3, %v2
  %s5 = scalar_lea.vmem %s1, 4294967265
  %6 = vst.msk [vmem:[%s5] ss:$8 sm:$0xf0] %vm3, %v2
  %s7 = scalar_lea.vmem %s0, 32
  %v8 = vld [vmem:[%s7] ss:$4 sm:$0xff]
  %vm9 = vcmask 261120
  %s10 = scalar_lea.vmem %s1, 2
  %11 = vst.msk [vmem:[%s10] ss:$8 sm:$0xf] %vm9, %v8
  %s12 = scalar_lea.vmem %s1, 4294967267
  %13 = vst.msk [vmem:[%s12] ss:$8 sm:$0xf0] %vm9, %v8
  %s14 = scalar_lea.vmem %s0, 64
  %v15 = vld [vmem:[%s14] ss:$4 sm:$0xff]
  %vm16 = vcmask 261120
  %s17 = scalar_lea.vmem %s1, 4
  %18 = vst.msk [vmem:[%s17] ss:$8 sm:$0xf] %vm16, %v15
  %s19 = scalar_lea.vmem %s1, 4294967269
  %20 = vst.msk [vmem:[%s19] ss:$8 sm:$0xf0] %vm16, %v15
  %s21 = scalar_lea.vmem %s0, 96
  %v22 = vld [vmem:[%s21] ss:$4 sm:$0xff]
  %vm23 = vcmask 261120
  %s24 = scalar_lea.vmem %s1, 6
  %25 = vst.msk [vmem:[%s24] ss:$8 sm:$0xf] %vm23, %v22
  %s26 = scalar_lea.vmem %s1, 4294967271
  %27 = vst.msk [vmem:[%s26] ss:$8 sm:$0xf0] %vm23, %v22
  %s28 = scalar_lea.vmem %s0, 3
  %s29 = smov 3
  %v30 = vld [vmem:[%s28] ss:$16 sm:%s29]
  %s31 = scalar_lea.vmem %s0, 3
  %s32 = smov 12
  %v33 = vld [vmem:[%s31] ss:$16 sm:%s32]
  %vm34 = vcmask 1043458
  %v35 = vsel %vm34, %v33, %v30
  %s36 = scalar_lea.vmem %s0, 3
  %s37 = smov 48
  %v38 = vld [vmem:[%s36] ss:$16 sm:%s37]
  %vm39 = vcmask 1045508
  %v40 = vsel %vm39, %v38, %v35
  %s41 = scalar_lea.vmem %s0, 3
  %s42 = smov 192
  %v43 = vld [vmem:[%s41] ss:$16 sm:%s42]
  %vm44 = vcmask 1047558
  %v45 = vsel %vm44, %v43, %v40
  %46 = vrot.lane.b32.xlu0 %v45, 96
  %v47 = vpop.permute.xlu0 %46
  %vm48 = vcmask 1048320
  %49 = vst.msk [vmem:[%s1] sm:$0xff] %vm48, %v47
  %s50 = scalar_lea.vmem %s0, 7
  %s51 = smov 3
  %v52 = vld [vmem:[%s50] ss:$16 sm:%s51]
  %s53 = scalar_lea.vmem %s0, 7
  %s54 = smov 12
  %v55 = vld [vmem:[%s53] ss:$16 sm:%s54]
  %vm56 = vcmask 1043458
  %v57 = vsel %vm56, %v55, %v52
  %s58 = scalar_lea.vmem %s0, 7
  %s59 = smov 48
  %v60 = vld [vmem:[%s58] ss:$16 sm:%s59]
  %vm61 = vcmask 1045508
  %v62 = vsel %vm61, %v60, %v57
  %s63 = scalar_lea.vmem %s0, 7
  %s64 = smov 192
  %v65 = vld [vmem:[%s63] ss:$16 sm:%s64]
  %vm66 = vcmask 1047558
  %v67 = vsel %vm66, %v65, %v62
  %68 = vrot.lane.b32.xlu0 %v67, 96
  %v69 = vpop.permute.xlu0 %68
  %vm70 = vcmask 1048320
  %s71 = scalar_lea.vmem %s1, 8
  %72 = vst.msk [vmem:[%s71] sm:$0xff] %vm70, %v69
  %s73 = scalar_lea.vmem %s0, 11
  %s74 = smov 3
  %v75 = vld [vmem:[%s73] ss:$16 sm:%s74]
  %s76 = scalar_lea.vmem %s0, 11
  %s77 = smov 12
  %v78 = vld [vmem:[%s76] ss:$16 sm:%s77]
  %vm79 = vcmask 1043458
  %v80 = vsel %vm79, %v78, %v75
  %s81 = scalar_lea.vmem %s0, 11
  %s82 = smov 48
  %v83 = vld [vmem:[%s81] ss:$16 sm:%s82]
  %vm84 = vcmask 1045508
  %v85 = vsel %vm84, %v83, %v80
  %s86 = scalar_lea.vmem %s0, 11
  %s87 = smov 192
  %v88 = vld [vmem:[%s86] ss:$16 sm:%s87]
  %vm89 = vcmask 1047558
  %v90 = vsel %vm89, %v88, %v85
  %91 = vrot.lane.b32.xlu0 %v90, 96
  %v92 = vpop.permute.xlu0 %91
  %vm93 = vcmask 1048320
  %s94 = scalar_lea.vmem %s1, 16
  %95 = vst.msk [vmem:[%s94] sm:$0xff] %vm93, %v92
  %s96 = scalar_lea.vmem %s0, 15
  %s97 = smov 3
  %v98 = vld [vmem:[%s96] ss:$16 sm:%s97]
  %s99 = scalar_lea.vmem %s0, 15
  %s100 = smov 12
  %v101 = vld [vmem:[%s99] ss:$16 sm:%s100]
  %vm102 = vcmask 1043458
  %v103 = vsel %vm102, %v101, %v98
  %s104 = scalar_lea.vmem %s0, 15
  %s105 = smov 48
  %v106 = vld [vmem:[%s104] ss:$16 sm:%s105]
  %vm107 = vcmask 1045508
  %v108 = vsel %vm107, %v106, %v103
  %s109 = scalar_lea.vmem %s0, 15
  %s110 = smov 192
  %v111 = vld [vmem:[%s109] ss:$16 sm:%s110]
  %vm112 = vcmask 1047558
  %v113 = vsel %vm112, %v111, %v108
  %114 = vrot.lane.b32.xlu0 %v113, 96
  %v115 = vpop.permute.xlu0 %114
  %vm116 = vcmask 1048320
  %s117 = scalar_lea.vmem %s1, 24
  %118 = vst.msk [vmem:[%s117] sm:$0xff] %vm116, %v115
  %s119 = scalar_lea.vmem %s0, 2
  %s120 = smov 3
  %v121 = vld [vmem:[%s119] ss:$16 sm:%s120]
  %s122 = scalar_lea.vmem %s0, 2
  %s123 = smov 12
  %v124 = vld [vmem:[%s122] ss:$16 sm:%s123]
  %vm125 = vcmask 1043458
  %v126 = vsel %vm125, %v124, %v121
  %s127 = scalar_lea.vmem %s0, 2
  %s128 = smov 48
  %v129 = vld [vmem:[%s127] ss:$16 sm:%s128]
  %vm130 = vcmask 1045508
  %v131 = vsel %vm130, %v129, %v126
  %s132 = scalar_lea.vmem %s0, 2
  %s133 = smov 192
  %v134 = vld [vmem:[%s132] ss:$16 sm:%s133]
  %vm135 = vcmask 1047558
  %v136 = vsel %vm135, %v134, %v131
  %137 = vrot.lane.b32.xlu0 %v136, 64
  %v138 = vpop.permute.xlu0 %137
  %vm139 = vcmask 785920
  %140 = vst.msk [vmem:[%s1] sm:$0xff] %vm139, %v138
  %s141 = scalar_lea.vmem %s0, 6
  %s142 = smov 3
  %v143 = vld [vmem:[%s141] ss:$16 sm:%s142]
  %s144 = scalar_lea.vmem %s0, 6
  %s145 = smov 12
  %v146 = vld [vmem:[%s144] ss:$16 sm:%s145]
  %vm147 = vcmask 1043458
  %v148 = vsel %vm147, %v146, %v143
  %s149 = scalar_lea.vmem %s0, 6
  %s150 = smov 48
  %v151 = vld [vmem:[%s149] ss:$16 sm:%s150]
  %vm152 = vcmask 1045508
  %v153 = vsel %vm152, %v151, %v148
  %s154 = scalar_lea.vmem %s0, 6
  %s155 = smov 192
  %v156 = vld [vmem:[%s154] ss:$16 sm:%s155]
  %vm157 = vcmask 1047558
  %v158 = vsel %vm157, %v156, %v153
  %159 = vrot.lane.b32.xlu0 %v158, 64
  %v160 = vpop.permute.xlu0 %159
  %vm161 = vcmask 785920
  %s162 = scalar_lea.vmem %s1, 8
  %163 = vst.msk [vmem:[%s162] sm:$0xff] %vm161, %v160
  %s164 = scalar_lea.vmem %s0, 10
  %s165 = smov 3
  %v166 = vld [vmem:[%s164] ss:$16 sm:%s165]
  %s167 = scalar_lea.vmem %s0, 10
  %s168 = smov 12
  %v169 = vld [vmem:[%s167] ss:$16 sm:%s168]
  %vm170 = vcmask 1043458
  %v171 = vsel %vm170, %v169, %v166
  %s172 = scalar_lea.vmem %s0, 10
  %s173 = smov 48
  %v174 = vld [vmem:[%s172] ss:$16 sm:%s173]
  %vm175 = vcmask 1045508
  %v176 = vsel %vm175, %v174, %v171
  %s177 = scalar_lea.vmem %s0, 10
  %s178 = smov 192
  %v179 = vld [vmem:[%s177] ss:$16 sm:%s178]
  %vm180 = vcmask 1047558
  %v181 = vsel %vm180, %v179, %v176
  %182 = vrot.lane.b32.xlu0 %v181, 64
  %v183 = vpop.permute.xlu0 %182
  %vm184 = vcmask 785920
  %s185 = scalar_lea.vmem %s1, 16
  %186 = vst.msk [vmem:[%s185] sm:$0xff] %vm184, %v183
  %s187 = scalar_lea.vmem %s0, 14
  %s188 = smov 3
  %v189 = vld [vmem:[%s187] ss:$16 sm:%s188]
  %s190 = scalar_lea.vmem %s0, 14
  %s191 = smov 12
  %v192 = vld [vmem:[%s190] ss:$16 sm:%s191]
  %vm193 = vcmask 1043458
  %v194 = vsel %vm193, %v192, %v189
  %s195 = scalar_lea.vmem %s0, 14
  %s196 = smov 48
  %v197 = vld [vmem:[%s195] ss:$16 sm:%s196]
  %vm198 = vcmask 1045508
  %v199 = vsel %vm198, %v197, %v194
  %s200 = scalar_lea.vmem %s0, 14
  %s201 = smov 192
  %v202 = vld [vmem:[%s200] ss:$16 sm:%s201]
  %vm203 = vcmask 1047558
  %v204 = vsel %vm203, %v202, %v199
  %205 = vrot.lane.b32.xlu0 %v204, 64
  %v206 = vpop.permute.xlu0 %205
  %vm207 = vcmask 785920
  %s208 = scalar_lea.vmem %s1, 24
  %209 = vst.msk [vmem:[%s208] sm:$0xff] %vm207, %v206
  %s210 = scalar_lea.vmem %s0, 1
  %s211 = smov 3
  %v212 = vld [vmem:[%s210] ss:$16 sm:%s211]
  %s213 = scalar_lea.vmem %s0, 1
  %s214 = smov 12
  %v215 = vld [vmem:[%s213] ss:$16 sm:%s214]
  %vm216 = vcmask 1043458
  %v217 = vsel %vm216, %v215, %v212
  %s218 = scalar_lea.vmem %s0, 1
  %s219 = smov 48
  %v220 = vld [vmem:[%s218] ss:$16 sm:%s219]
  %vm221 = vcmask 1045508
  %v222 = vsel %vm221, %v220, %v217
  %s223 = scalar_lea.vmem %s0, 1
  %s224 = smov 192
  %v225 = vld [vmem:[%s223] ss:$16 sm:%s224]
  %vm226 = vcmask 1047558
  %v227 = vsel %vm226, %v225, %v222
  %228 = vrot.lane.b32.xlu0 %v227, 32
  %v229 = vpop.permute.xlu0 %228
  %vm230 = vcmask 523520
  %231 = vst.msk [vmem:[%s1] sm:$0xff] %vm230, %v229
  %s232 = scalar_lea.vmem %s0, 5
  %s233 = smov 3
  %v234 = vld [vmem:[%s232] ss:$16 sm:%s233]
  %s235 = scalar_lea.vmem %s0, 5
  %s236 = smov 12
  %v237 = vld [vmem:[%s235] ss:$16 sm:%s236]
  %vm238 = vcmask 1043458
  %v239 = vsel %vm238, %v237, %v234
  %s240 = scalar_lea.vmem %s0, 5
  %s241 = smov 48
  %v242 = vld [vmem:[%s240] ss:$16 sm:%s241]
  %vm243 = vcmask 1045508
  %v244 = vsel %vm243, %v242, %v239
  %s245 = scalar_lea.vmem %s0, 5
  %s246 = smov 192
  %v247 = vld [vmem:[%s245] ss:$16 sm:%s246]
  %vm248 = vcmask 1047558
  %v249 = vsel %vm248, %v247, %v244
  %250 = vrot.lane.b32.xlu0 %v249, 32
  %v251 = vpop.permute.xlu0 %250
  %vm252 = vcmask 523520
  %s253 = scalar_lea.vmem %s1, 8
  %254 = vst.msk [vmem:[%s253] sm:$0xff] %vm252, %v251
  %s255 = scalar_lea.vmem %s0, 9
  %s256 = smov 3
  %v257 = vld [vmem:[%s255] ss:$16 sm:%s256]
  %s258 = scalar_lea.vmem %s0, 9
  %s259 = smov 12
  %v260 = vld [vmem:[%s258] ss:$16 sm:%s259]
  %vm261 = vcmask 1043458
  %v262 = vsel %vm261, %v260, %v257
  %s263 = scalar_lea.vmem %s0, 9
  %s264 = smov 48
  %v265 = vld [vmem:[%s263] ss:$16 sm:%s264]
  %vm266 = vcmask 1045508
  %v267 = vsel %vm266, %v265, %v262
  %s268 = scalar_lea.vmem %s0, 9
  %s269 = smov 192
  %v270 = vld [vmem:[%s268] ss:$16 sm:%s269]
  %vm271 = vcmask 1047558
  %v272 = vsel %vm271, %v270, %v267
  %273 = vrot.lane.b32.xlu0 %v272, 32
  %v274 = vpop.permute.xlu0 %273
  %vm275 = vcmask 523520
  %s276 = scalar_lea.vmem %s1, 16
  %277 = vst.msk [vmem:[%s276] sm:$0xff] %vm275, %v274
  %s278 = scalar_lea.vmem %s0, 13
  %s279 = smov 3
  %v280 = vld [vmem:[%s278] ss:$16 sm:%s279]
  %s281 = scalar_lea.vmem %s0, 13
  %s282 = smov 12
  %v283 = vld [vmem:[%s281] ss:$16 sm:%s282]
  %vm284 = vcmask 1043458
  %v285 = vsel %vm284, %v283, %v280
  %s286 = scalar_lea.vmem %s0, 13
  %s287 = smov 48
  %v288 = vld [vmem:[%s286] ss:$16 sm:%s287]
  %vm289 = vcmask 1045508
  %v290 = vsel %vm289, %v288, %v285
  %s291 = scalar_lea.vmem %s0, 13
  %s292 = smov 192
  %v293 = vld [vmem:[%s291] ss:$16 sm:%s292]
  %vm294 = vcmask 1047558
  %v295 = vsel %vm294, %v293, %v290
  %296 = vrot.lane.b32.xlu0 %v295, 32
  %v297 = vpop.permute.xlu0 %296
  %vm298 = vcmask 523520
  %s299 = scalar_lea.vmem %s1, 24
  %300 = vst.msk [vmem:[%s299] sm:$0xff] %vm298, %v297

// kernel: hypercube_forward.1
$region0: #{hypercube_forward.1}
  #allocation0 [shape = 'u32[]', space=smem, size = 0x4, offset = 0x4, fixed_abs, tag = 'smem constant byte address 0x4 - core index']
  #allocation1 [shape = 'u32[144,128]{1,0:T(1,128)}', space=vmem, size = 0x12000, scoped, tag = 'internal scratch']
  %s0 = inlined_call_operand.vmem [shape: f32[8,512], index: 0, kind: input, shape index: {}]
  %s1 = inlined_call_operand.vmem [shape: f32[2,2,512], index: 1, kind: input, shape index: {}]
  %s2 = inlined_call_operand.hbm [shape: f32[2,512,512], index: 2, kind: input, shape index: {}]
  %s3 = inlined_call_operand.hbm [shape: f32[2,512,128], index: 3, kind: input, shape index: {}]
  %s4 = inlined_call_operand.vmem [shape: f32[2,2,128], index: 4, kind: input, shape index: {}]
  %s5 = inlined_call_operand.vmem [shape: f32[2,8,512], index: 5, kind: output, shape index: {0}]
  %s6 = inlined_call_operand.vmem [shape: f32[2,8,128], index: 6, kind: output, shape index: {1}]
  %7 = xla_tuple %s5, %s6
  %s8 = sld [smem:[#allocation0]]
  $region69: #{hypercube_forward.1} parent=0
    _
  %s10 = ssub.s32 1, %s8
  %s11 = scalar_select 0, %s10, %s8
  $region1: #{hypercube_forward.1} parent=0
    #allocation2 [shape = 'u8[2097152]{0}', space=vmem, size = 0x200000, scoped, tag = 'input window, operand 2']
    #allocation3 [shape = 's32[2]{0}', space=sflag, size = 0x8, scoped, tag = 'scoped memory for hypercube_forward.1']
    #allocation4 [shape = 'u8[524288]{0}', space=vmem, size = 0x80000, scoped, tag = 'input window, operand 3']
    #allocation5 [shape = 's32[2]{0}', space=sflag, size = 0x8, scoped, tag = 'scoped memory for hypercube_forward.1']
    %12 = vsyncpa [#allocation3], 0
    %s13 = scalar_lea.sflag [#allocation3], 1
    %14 = vsyncpa %s13, 0
    %15 = vsyncpa [#allocation5], 0
    %s16 = scalar_lea.sflag [#allocation5], 1
    %17 = vsyncpa %s16, 0
    loop: start=0, step=1, limit=4
    $region2: #{hypercube_forward.1} parent=1 // loop_pre_header
      _
    $region3: #{hypercube_forward.1} parent=1 // loop_header
      %s19 = sphi 0, %s23
      %p20 = scmp.ge.s32.totalorder %s19, 4
      %s27 = sphi 0, %s27
      %s29 = sphi 0, %s27
      %s30 = sphi 0, %s29
      %s44 = sphi 0, %s30
      %s50 = sphi 0, %s52
      %s53 = sphi 0, %s50
      %s54 = sphi 0, %s53
      %s70 = sphi 0, %s54
      %s76 = sphi 0, %s78
      %s79 = sphi 0, %s76
      %s80 = sphi 0, %s79
      %s96 = sphi 0, %s80
      %s102 = sphi 0, %s104
      %s105 = sphi 0, %s102
      %s106 = sphi 0, %s105
      %s122 = sphi 0, %s106
      %s128 = sphi 0, %s130
      %s131 = sphi 0, %s128
      %s132 = sphi 0, %s131
      %s148 = sphi 0, %s132
      %s154 = sphi 0, %s156
      %s157 = sphi 0, %s154
      %s158 = sphi 0, %s157
      %s174 = sphi 0, %s158
      %s180 = sphi 0, %s182
      %s183 = sphi 0, %s180
      %s184 = sphi 0, %s183
      %s200 = sphi 0, %s184
    $region4: #{hypercube_forward.1} parent=1 // loop_header_branch
      %22 = sbr.rel (%p20) target = $region8
    $region5: #{hypercube_forward.1} parent=1 // loop_body
      %s24 = ssub.s32 %s19, 1
      %s25 = ssub.s32 %s19, 2
      %s26 = sadd.s32 %s19, 1
      %s28 = sadd.s32 %s27, 1
      %p31 = scmp.eq.s32.totalorder %s19, 1
      %p32 = scmp.ne.s32.totalorder %s27, %s29
      %p33 = scmp.eq.s32.totalorder %s19, 0
      %p34 = por %p32, %p33
      %p35 = scmp.ne.s32.totalorder %s27, %s29
      %p36 = scmp.eq.s32.totalorder %s24, 1
      %p37 = por %p35, %p36
      %p38 = scmp.ne.s32.totalorder %s29, %s30
      %p39 = scmp.eq.s32.totalorder %s24, 0
      %p40 = por %p38, %p39
      %p41 = scmp.ne.s32.totalorder %s29, %s30
      %p42 = scmp.eq.s32.totalorder %s25, 1
      %p43 = por %p41, %p42
      %p45 = scmp.ne.s32.totalorder %s30, %s44
      %p46 = scmp.eq.s32.totalorder %s25, 0
      %p47 = por %p45, %p46
      %s48 = ssub.s32 %s19, %s26
      %p49 = scmp.eq.s32.totalorder %s48, 0
      %s51 = sadd.s32 %s50, 1
      %s52 = scalar_select %p49, %s50, %s51
      %p55 = pneg %p49
      %p56 = scmp.eq.s32.totalorder %s19, 1
      %p57 = por %p55, %p56
      %p58 = scmp.ne.s32.totalorder %s50, %s53
      %p59 = scmp.eq.s32.totalorder %s19, 0
      %p60 = por %p58, %p59
      %p61 = scmp.ne.s32.totalorder %s50, %s53
      %p62 = scmp.eq.s32.totalorder %s24, 1
      %p63 = por %p61, %p62
      %p64 = scmp.ne.s32.totalorder %s53, %s54
      %p65 = scmp.eq.s32.totalorder %s24, 0
      %p66 = por %p64, %p65
      %p67 = scmp.ne.s32.totalorder %s53, %s54
      %p68 = scmp.eq.s32.totalorder %s25, 1
      %p69 = por %p67, %p68
      %p71 = scmp.ne.s32.totalorder %s54, %s70
      %p72 = scmp.eq.s32.totalorder %s25, 0
      %p73 = por %p71, %p72
      %s74 = ssub.s32 %s19, %s26
      %p75 = scmp.eq.s32.totalorder %s74, 0
      %s77 = sadd.s32 %s76, 1
      %s78 = scalar_select %p75, %s76, %s77
      %p81 = pneg %p75
      %p82 = scmp.eq.s32.totalorder %s19, 1
      %p83 = por %p81, %p82
      %p84 = scmp.ne.s32.totalorder %s76, %s79
      %p85 = scmp.eq.s32.totalorder %s19, 0
      %p86 = por %p84, %p85
      %p87 = scmp.ne.s32.totalorder %s76, %s79
      %p88 = scmp.eq.s32.totalorder %s24, 1
      %p89 = por %p87, %p88
      %p90 = scmp.ne.s32.totalorder %s79, %s80
      %p91 = scmp.eq.s32.totalorder %s24, 0
      %p92 = por %p90, %p91
      %p93 = scmp.ne.s32.totalorder %s79, %s80
      %p94 = scmp.eq.s32.totalorder %s25, 1
      %p95 = por %p93, %p94
      %p97 = scmp.ne.s32.totalorder %s80, %s96
      %p98 = scmp.eq.s32.totalorder %s25, 0
      %p99 = por %p97, %p98
      %s100 = ssub.s32 %s19, %s26
      %p101 = scmp.eq.s32.totalorder %s100, 0
      %s103 = sadd.s32 %s102, 1
      %s104 = scalar_select %p101, %s102, %s103
      %p107 = pneg %p101
      %p108 = scmp.eq.s32.totalorder %s19, 1
      %p109 = por %p107, %p108
      %p110 = scmp.ne.s32.totalorder %s102, %s105
      %p111 = scmp.eq.s32.totalorder %s19, 0
      %p112 = por %p110, %p111
      %p113 = scmp.ne.s32.totalorder %s102, %s105
      %p114 = scmp.eq.s32.totalorder %s24, 1
      %p115 = por %p113, %p114
      %p116 = scmp.ne.s32.totalorder %s105, %s106
      %p117 = scmp.eq.s32.totalorder %s24, 0
      %p118 = por %p116, %p117
      %p119 = scmp.ne.s32.totalorder %s105, %s106
      %p120 = scmp.eq.s32.totalorder %s25, 1
      %p121 = por %p119, %p120
      %p123 = scmp.ne.s32.totalorder %s106, %s122
      %p124 = scmp.eq.s32.totalorder %s25, 0
      %p125 = por %p123, %p124
      %s126 = ssub.s32 %s19, %s26
      %p127 = scmp.eq.s32.totalorder %s126, 0
      %s129 = sadd.s32 %s128, 1
      %s130 = scalar_select %p127, %s128, %s129
      %p133 = pneg %p127
      %p134 = scmp.eq.s32.totalorder %s19, 1
      %p135 = por %p133, %p134
      %p136 = scmp.ne.s32.totalorder %s128, %s131
      %p137 = scmp.eq.s32.totalorder %s19, 0
      %p138 = por %p136, %p137
      %p139 = scmp.ne.s32.totalorder %s128, %s131
      %p140 = scmp.eq.s32.totalorder %s24, 1
      %p141 = por %p139, %p140
      %p142 = scmp.ne.s32.totalorder %s131, %s132
      %p143 = scmp.eq.s32.totalorder %s24, 0
      %p144 = por %p142, %p143
      %p145 = scmp.ne.s32.totalorder %s131, %s132
      %p146 = scmp.eq.s32.totalorder %s25, 1
      %p147 = por %p145, %p146
      %p149 = scmp.ne.s32.totalorder %s132, %s148
      %p150 = scmp.eq.s32.totalorder %s25, 0
      %p151 = por %p149, %p150
      %s152 = ssub.s32 %s19, %s26
      %p153 = scmp.eq.s32.totalorder %s152, 0
      %s155 = sadd.s32 %s154, 1
      %s156 = scalar_select %p153, %s154, %s155
      %p159 = pneg %p153
      %p160 = scmp.eq.s32.totalorder %s19, 1
      %p161 = por %p159, %p160
      %p162 = scmp.ne.s32.totalorder %s154, %s157
      %p163 = scmp.eq.s32.totalorder %s19, 0
      %p164 = por %p162, %p163
      %p165 = scmp.ne.s32.totalorder %s154, %s157
      %p166 = scmp.eq.s32.totalorder %s24, 1
      %p167 = por %p165, %p166
      %p168 = scmp.ne.s32.totalorder %s157, %s158
      %p169 = scmp.eq.s32.totalorder %s24, 0
      %p170 = por %p168, %p169
      %p171 = scmp.ne.s32.totalorder %s157, %s158
      %p172 = scmp.eq.s32.totalorder %s25, 1
      %p173 = por %p171, %p172
      %p175 = scmp.ne.s32.totalorder %s158, %s174
      %p176 = scmp.eq.s32.totalorder %s25, 0
      %p177 = por %p175, %p176
      %s178 = ssub.s32 %s19, %s26
      %p179 = scmp.eq.s32.totalorder %s178, 0
      %s181 = sadd.s32 %s180, 1
      %s182 = scalar_select %p179, %s180, %s181
      %p185 = pneg %p179
      %p186 = scmp.eq.s32.totalorder %s19, 1
      %p187 = por %p185, %p186
      %p188 = scmp.ne.s32.totalorder %s180, %s183
      %p189 = scmp.eq.s32.totalorder %s19, 0
      %p190 = por %p188, %p189
      %p191 = scmp.ne.s32.totalorder %s180, %s183
      %p192 = scmp.eq.s32.totalorder %s24, 1
      %p193 = por %p191, %p192
      %p194 = scmp.ne.s32.totalorder %s183, %s184
      %p195 = scmp.eq.s32.totalorder %s24, 0
      %p196 = por %p194, %p195
      %p197 = scmp.ne.s32.totalorder %s183, %s184
      %p198 = scmp.eq.s32.totalorder %s25, 1
      %p199 = por %p197, %p198
      %p201 = scmp.ne.s32.totalorder %s184, %s200
      %p202 = scmp.eq.s32.totalorder %s25, 0
      %p203 = por %p201, %p202
      %p204 = scmp.le.s32.totalorder 1, %s19
      %p205 = scmp.lt.s32.totalorder %s19, 3
      %p206 = pnand %p204, %p205
      %p207 = pneg %p206
      // Predicated region
      $region9: #{hypercube_forward.1} parent=5 // pred_check
        _
      $region10: #{hypercube_forward.1} parent=5 // pred_check_branch
        %209 = sbr.rel (%p206) target = $region12
      $region11: #{hypercube_forward.1} parent=5 // pred_region
        %s210 = ssub.s32 %s19, 1
        // Predicated region
        $region13: #{hypercube_forward.1} parent=11 // pred_check
          %p211 = pneg %p40
        $region14: #{hypercube_forward.1} parent=11 // pred_check_branch
          %213 = sbr.rel (%p211) target = $region16
        $region15: #{hypercube_forward.1} parent=11 // pred_region
          _
        $region16: #{hypercube_forward.1} parent=11 // pred_fallthru
          _
      $region12: #{hypercube_forward.1} parent=5 // pred_fallthru
        _
      %p214 = scmp.lt.s32.totalorder %s19, 2
      // Predicated region
      $region17: #{hypercube_forward.1} parent=5 // pred_check
        %p215 = pneg %p214
      $region18: #{hypercube_forward.1} parent=5 // pred_check_branch
        %217 = sbr.rel (%p215) target = $region20
      $region19: #{hypercube_forward.1} parent=5 // pred_region
        // Predicated region
        $region21: #{hypercube_forward.1} parent=19 // pred_check
          %p218 = pneg %p60
        $region22: #{hypercube_forward.1} parent=19 // pred_check_branch
          %220 = sbr.rel (%p218) target = $region24
        $region23: #{hypercube_forward.1} parent=19 // pred_region
          %p221 = scmp.lt.s32.totalorder %s19, 1
          %s222 = scalar_select %p221, %s19, 1
          %s223 = smul.addr %s222, 4
          %s224 = smul.addr %s223, 2
          %s225 = scalar_lea.vmem %s1, %s224
        $region24: #{hypercube_forward.1} parent=19 // pred_fallthru
          _
        // Predicated region
        $region25: #{hypercube_forward.1} parent=19 // pred_check
          %p226 = pneg %p86
        $region26: #{hypercube_forward.1} parent=19 // pred_check_branch
          %228 = sbr.rel (%p226) target = $region28
        $region27: #{hypercube_forward.1} parent=19 // pred_region
          %s229 = sand.u32 %s76, 1
          %s230 = scalar_lea.sflag [#allocation3], %s229
          %s231 = sand.u32 %s76, 1
          %s232 = smul.addr %s231, 2048
          %s233 = scalar_lea.vmem [#allocation2], %s232
          %s235 = ssub.s32 32768, 32768
          %236 = vsyncadd %s230, %s235
          %s237 = smul.addr %s19, 256
          %s238 = smul.addr %s237, 128
          %s239 = scalar_lea.hbm %s2, %s238
          %s240 = sshll.u32 %s233, 4
          %s241 = int_to_ptr.vmem [resolvable:$true] %s240
          %246 = dma.hbm_to_vmem [thread:$0]  %s239, 32768, %s241, %s230, 512, 512, 32
        $region28: #{hypercube_forward.1} parent=19 // pred_fallthru
          _
        // Predicated region
        $region29: #{hypercube_forward.1} parent=19 // pred_check
          %p247 = pneg %p112
        $region30: #{hypercube_forward.1} parent=19 // pred_check_branch
          %249 = sbr.rel (%p247) target = $region32
        $region31: #{hypercube_forward.1} parent=19 // pred_region
          %s250 = sand.u32 %s102, 1
          %s251 = scalar_lea.sflag [#allocation5], %s250
          %s252 = sand.u32 %s102, 1
          %s253 = smul.addr %s252, 512
          %s254 = scalar_lea.vmem [#allocation4], %s253
          %s256 = ssub.s32 8192, 8192
          %257 = vsyncadd %s251, %s256
          %s258 = smul.addr %s19, 64
          %s259 = smul.addr %s258, 128
          %s260 = scalar_lea.hbm %s3, %s259
          %s261 = sshll.u32 %s254, 4
          %s262 = int_to_ptr.vmem [resolvable:$true] %s261
          %267 = dma.hbm_to_vmem [thread:$0]  %s260, 8192, %s262, %s251, 128, 128, 8
        $region32: #{hypercube_forward.1} parent=19 // pred_fallthru
          _
        // Predicated region
        $region33: #{hypercube_forward.1} parent=19 // pred_check
          %p268 = pneg %p138
        $region34: #{hypercube_forward.1} parent=19 // pred_check_branch
          %270 = sbr.rel (%p268) target = $region36
        $region35: #{hypercube_forward.1} parent=19 // pred_region
          %p271 = scmp.lt.s32.totalorder %s19, 1
          %s272 = scalar_select %p271, %s19, 1
          %s273 = smul.addr %s272, 2
          %s274 = scalar_lea.vmem %s4, %s273
        $region36: #{hypercube_forward.1} parent=19 // pred_fallthru
          _
      $region20: #{hypercube_forward.1} parent=5 // pred_fallthru
        _
      %p275 = scmp.le.s32.totalorder 1, %s19
      %p276 = scmp.lt.s32.totalorder %s19, 3
      %p277 = pnand %p275, %p276
      %p278 = pneg %p277
      // Predicated region
      $region37: #{hypercube_forward.1} parent=5 // pred_check
        _
      $region38: #{hypercube_forward.1} parent=5 // pred_check_branch
        %280 = sbr.rel (%p277) target = $region40
      $region39: #{hypercube_forward.1} parent=5 // pred_region
        %s281 = ssub.s32 %s19, 1
        %s282 = sand.u32 %s79, 1
        %s283 = scalar_lea.sflag [#allocation3], %s282
        %s284 = sand.u32 %s79, 1
        %s285 = smul.addr %s284, 2048
        %s286 = scalar_lea.vmem [#allocation2], %s285
        // Predicated region
        $region41: #{hypercube_forward.1} parent=39 // pred_check
          %p287 = pneg %p92
        $region42: #{hypercube_forward.1} parent=39 // pred_check_branch
          %289 = sbr.rel (%p287) target = $region44
        $region43: #{hypercube_forward.1} parent=39 // pred_region
          %290 = dma.done %s283, 32768
        $region44: #{hypercube_forward.1} parent=39 // pred_fallthru
          _
        %s291 = sand.u32 %s105, 1
        %s292 = scalar_lea.sflag [#allocation5], %s291
        %s293 = sand.u32 %s105, 1
        %s294 = smul.addr %s293, 512
        %s295 = scalar_lea.vmem [#allocation4], %s294
        // Predicated region
        $region45: #{hypercube_forward.1} parent=39 // pred_check
          %p296 = pneg %p118
        $region46: #{hypercube_forward.1} parent=39 // pred_check_branch
          %298 = sbr.rel (%p296) target = $region48
        $region47: #{hypercube_forward.1} parent=39 // pred_region
          %299 = dma.done %s292, 8192
        $region48: #{hypercube_forward.1} parent=39 // pred_fallthru
          _
        %p300 = pneg %p40
        %p301 = pneg %p37
        %p302 = scmp.lt.s32.totalorder %s24, 1
        %s303 = scalar_select %p302, %s24, 1
        %s304 = smul.addr %s303, 4
        %s305 = smul.addr %s304, 2
        %s306 = scalar_lea.vmem %s1, %s305
        %p307 = pneg %p66
        %p308 = pneg %p63
        %s309 = sand.u32 %s79, 1
        %s310 = scalar_lea.sflag [#allocation3], %s309
        %s311 = sand.u32 %s79, 1
        %s312 = smul.addr %s311, 2048
        %s313 = scalar_lea.vmem [#allocation2], %s312
        %p314 = pneg %p92
        %p315 = pneg %p89
        %s316 = sand.u32 %s105, 1
        %s317 = scalar_lea.sflag [#allocation5], %s316
        %s318 = sand.u32 %s105, 1
        %s319 = smul.addr %s318, 512
        %s320 = scalar_lea.vmem [#allocation4], %s319
        %p321 = pneg %p118
        %p322 = pneg %p115
        %p323 = scmp.lt.s32.totalorder %s24, 1
        %s324 = scalar_select %p323, %s24, 1
        %s325 = smul.addr %s324, 2
        %s326 = scalar_lea.vmem %s4, %s325
        %p327 = pneg %p144
        %p328 = pneg %p141
        %p329 = pneg %p170
        %p330 = pneg %p167
        %p331 = scmp.lt.s32.totalorder %s24, 1
        %s332 = scalar_select %p331, %s24, 1
        %s333 = smul.addr %s332, 4
        %s334 = smul.addr %s333, 8
        %s335 = scalar_lea.vmem %s5, %s334
        %p336 = pneg %p196
        %p337 = pneg %p193
        %p338 = scmp.lt.s32.totalorder %s24, 1
        %s339 = scalar_select %p338, %s24, 1
        %s340 = smul.addr %s339, 8
        %s341 = scalar_lea.vmem %s6, %s340
        %p342 = scmp.lt.s32.totalorder %s24, 1
        %s343 = scalar_select %p342, %s24, 1
        %s344 = smul.addr %s343, 4
        %s345 = smul.addr %s344, 2
        %s346 = scalar_lea.vmem %s1, %s345
        %p347 = scmp.lt.s32.totalorder %s24, 1
        %s348 = scalar_select %p347, %s24, 1
        %s349 = smul.addr %s348, 2
        %s350 = scalar_lea.vmem %s4, %s349
        %p351 = scmp.lt.s32.totalorder %s24, 1
        %s352 = scalar_select %p351, %s24, 1
        %s353 = smul.addr %s352, 4
        %s354 = smul.addr %s353, 8
        %s355 = scalar_lea.vmem %s5, %s354
        %p356 = scmp.lt.s32.totalorder %s24, 1
        %s357 = scalar_select %p356, %s24, 1
        %s358 = smul.addr %s357, 8
        %s359 = scalar_lea.vmem %s6, %s358
        %v360 = vld [vmem:[%s0] sm:$0xff]
        %v361 = vld [vmem:[%s0 + $0x8] sm:$0xff]
        %v362 = vld [vmem:[%s0 + $0x10] sm:$0xff]
        %v363 = vld [vmem:[%s0 + $0x18] sm:$0xff]
        %v364 = vld [vmem:[%s346] ss:$2 sm:$0xf]
        %v366 = vlaneseq
        %v367 = vshrl.u32 %v366, 7
        %v368 = vsub.s32 0, %v367
        %v369 = vrot.slane %v364, %v368
        %v370 = vlaneseq
        %v371 = vshrl.u32 %v370, 7
        %v372 = vsub.s32 1, %v371
        %v373 = vrot.slane %v364, %v372
        %v374 = vlaneseq
        %v375 = vshrl.u32 %v374, 7
        %v376 = vsub.s32 2, %v375
        %v377 = vrot.slane %v364, %v376
        %v378 = vlaneseq
        %v379 = vshrl.u32 %v378, 7
        %v380 = vsub.s32 3, %v379
        %v381 = vrot.slane %v364, %v380
        %v386 = vmul.f32 %v360, %v369
        %v387 = vmul.f32 %v361, %v373
        %v388 = vmul.f32 %v362, %v377
        %v389 = vmul.f32 %v363, %v381
        %v390 = vld [vmem:[%s286] sm:$0xff]
        %v391 = vld [vmem:[%s286 + $0x8] sm:$0xff]
        %v392 = vld [vmem:[%s286 + $0x10] sm:$0xff]
        %v393 = vld [vmem:[%s286 + $0x18] sm:$0xff]
        %v394 = vld [vmem:[%s286 + $0x20] sm:$0xff]
        %v395 = vld [vmem:[%s286 + $0x28] sm:$0xff]
        %v396 = vld [vmem:[%s286 + $0x30] sm:$0xff]
        %v397 = vld [vmem:[%s286 + $0x38] sm:$0xff]
        %v398 = vld [vmem:[%s286 + $0x40] sm:$0xff]
        %v399 = vld [vmem:[%s286 + $0x48] sm:$0xff]
        %v400 = vld [vmem:[%s286 + $0x50] sm:$0xff]
        %v401 = vld [vmem:[%s286 + $0x58] sm:$0xff]
        %v402 = vld [vmem:[%s286 + $0x60] sm:$0xff]
        %v403 = vld [vmem:[%s286 + $0x68] sm:$0xff]
        %v404 = vld [vmem:[%s286 + $0x70] sm:$0xff]
        %v405 = vld [vmem:[%s286 + $0x78] sm:$0xff]
        %v406 = vld [vmem:[%s286 + $0x80] sm:$0xff]
        %v407 = vld [vmem:[%s286 + $0x88] sm:$0xff]
        %v408 = vld [vmem:[%s286 + $0x90] sm:$0xff]
        %v409 = vld [vmem:[%s286 + $0x98] sm:$0xff]
        %v410 = vld [vmem:[%s286 + $0xa0] sm:$0xff]
        %v411 = vld [vmem:[%s286 + $0xa8] sm:$0xff]
        %v412 = vld [vmem:[%s286 + $0xb0] sm:$0xff]
        %v413 = vld [vmem:[%s286 + $0xb8] sm:$0xff]
        %v414 = vld [vmem:[%s286 + $0xc0] sm:$0xff]
        %v415 = vld [vmem:[%s286 + $0xc8] sm:$0xff]
        %v416 = vld [vmem:[%s286 + $0xd0] sm:$0xff]
        %v417 = vld [vmem:[%s286 + $0xd8] sm:$0xff]
        %v418 = vld [vmem:[%s286 + $0xe0] sm:$0xff]
        %v419 = vld [vmem:[%s286 + $0xe8] sm:$0xff]
        %v420 = vld [vmem:[%s286 + $0xf0] sm:$0xff]
        %v421 = vld [vmem:[%s286 + $0xf8] sm:$0xff]
        %v422 = vld [vmem:[%s286 + $0x100] sm:$0xff]
        %v423 = vld [vmem:[%s286 + $0x108] sm:$0xff]
        %v424 = vld [vmem:[%s286 + $0x110] sm:$0xff]
        %v425 = vld [vmem:[%s286 + $0x118] sm:$0xff]
        %v426 = vld [vmem:[%s286 + $0x120] sm:$0xff]
        %v427 = vld [vmem:[%s286 + $0x128] sm:$0xff]
        %v428 = vld [vmem:[%s286 + $0x130] sm:$0xff]
        %v429 = vld [vmem:[%s286 + $0x138] sm:$0xff]
        %v430 = vld [vmem:[%s286 + $0x140] sm:$0xff]
        %v431 = vld [vmem:[%s286 + $0x148] sm:$0xff]
        %v432 = vld [vmem:[%s286 + $0x150] sm:$0xff]
        %v433 = vld [vmem:[%s286 + $0x158] sm:$0xff]
        %v434 = vld [vmem:[%s286 + $0x160] sm:$0xff]
        %v435 = vld [vmem:[%s286 + $0x168] sm:$0xff]
        %v436 = vld [vmem:[%s286 + $0x170] sm:$0xff]
        %v437 = vld [vmem:[%s286 + $0x178] sm:$0xff]
        %v438 = vld [vmem:[%s286 + $0x180] sm:$0xff]
        %v439 = vld [vmem:[%s286 + $0x188] sm:$0xff]
        %v440 = vld [vmem:[%s286 + $0x190] sm:$0xff]
        %v441 = vld [vmem:[%s286 + $0x198] sm:$0xff]
        %v442 = vld [vmem:[%s286 + $0x1a0] sm:$0xff]
        %v443 = vld [vmem:[%s286 + $0x1a8] sm:$0xff]
        %v444 = vld [vmem:[%s286 + $0x1b0] sm:$0xff]
        %v445 = vld [vmem:[%s286 + $0x1b8] sm:$0xff]
        %v446 = vld [vmem:[%s286 + $0x1c0] sm:$0xff]
        %v447 = vld [vmem:[%s286 + $0x1c8] sm:$0xff]
        %v448 = vld [vmem:[%s286 + $0x1d0] sm:$0xff]
        %v449 = vld [vmem:[%s286 + $0x1d8] sm:$0xff]
        %v450 = vld [vmem:[%s286 + $0x1e0] sm:$0xff]
        %v451 = vld [vmem:[%s286 + $0x1e8] sm:$0xff]
        %v452 = vld [vmem:[%s286 + $0x1f0] sm:$0xff]
        %v453 = vld [vmem:[%s286 + $0x1f8] sm:$0xff]
        %v454 = vld [vmem:[%s286 + $0x200] sm:$0xff]
        %v455 = vld [vmem:[%s286 + $0x208] sm:$0xff]
        %v456 = vld [vmem:[%s286 + $0x210] sm:$0xff]
        %v457 = vld [vmem:[%s286 + $0x218] sm:$0xff]
        %v458 = vld [vmem:[%s286 + $0x220] sm:$0xff]
        %v459 = vld [vmem:[%s286 + $0x228] sm:$0xff]
        %v460 = vld [vmem:[%s286 + $0x230] sm:$0xff]
        %v461 = vld [vmem:[%s286 + $0x238] sm:$0xff]
        %v462 = vld [vmem:[%s286 + $0x240] sm:$0xff]
        %v463 = vld [vmem:[%s286 + $0x248] sm:$0xff]
        %v464 = vld [vmem:[%s286 + $0x250] sm:$0xff]
        %v465 = vld [vmem:[%s286 + $0x258] sm:$0xff]
        %v466 = vld [vmem:[%s286 + $0x260] sm:$0xff]
        %v467 = vld [vmem:[%s286 + $0x268] sm:$0xff]
        %v468 = vld [vmem:[%s286 + $0x270] sm:$0xff]
        %v469 = vld [vmem:[%s286 + $0x278] sm:$0xff]
        %v470 = vld [vmem:[%s286 + $0x280] sm:$0xff]
        %v471 = vld [vmem:[%s286 + $0x288] sm:$0xff]
        %v472 = vld [vmem:[%s286 + $0x290] sm:$0xff]
        %v473 = vld [vmem:[%s286 + $0x298] sm:$0xff]
        %v474 = vld [vmem:[%s286 + $0x2a0] sm:$0xff]
        %v475 = vld [vmem:[%s286 + $0x2a8] sm:$0xff]
        %v476 = vld [vmem:[%s286 + $0x2b0] sm:$0xff]
        %v477 = vld [vmem:[%s286 + $0x2b8] sm:$0xff]
        %v478 = vld [vmem:[%s286 + $0x2c0] sm:$0xff]
        %v479 = vld [vmem:[%s286 + $0x2c8] sm:$0xff]
        %v480 = vld [vmem:[%s286 + $0x2d0] sm:$0xff]
        %v481 = vld [vmem:[%s286 + $0x2d8] sm:$0xff]
        %v482 = vld [vmem:[%s286 + $0x2e0] sm:$0xff]
        %v483 = vld [vmem:[%s286 + $0x2e8] sm:$0xff]
        %v484 = vld [vmem:[%s286 + $0x2f0] sm:$0xff]
        %v485 = vld [vmem:[%s286 + $0x2f8] sm:$0xff]
        %v486 = vld [vmem:[%s286 + $0x300] sm:$0xff]
        %v487 = vld [vmem:[%s286 + $0x308] sm:$0xff]
        %v488 = vld [vmem:[%s286 + $0x310] sm:$0xff]
        %v489 = vld [vmem:[%s286 + $0x318] sm:$0xff]
        %v490 = vld [vmem:[%s286 + $0x320] sm:$0xff]
        %v491 = vld [vmem:[%s286 + $0x328] sm:$0xff]
        %v492 = vld [vmem:[%s286 + $0x330] sm:$0xff]
        %v493 = vld [vmem:[%s286 + $0x338] sm:$0xff]
        %v494 = vld [vmem:[%s286 + $0x340] sm:$0xff]
        %v495 = vld [vmem:[%s286 + $0x348] sm:$0xff]
        %v496 = vld [vmem:[%s286 + $0x350] sm:$0xff]
        %v497 = vld [vmem:[%s286 + $0x358] sm:$0xff]
        %v498 = vld [vmem:[%s286 + $0x360] sm:$0xff]
        %v499 = vld [vmem:[%s286 + $0x368] sm:$0xff]
        %v500 = vld [vmem:[%s286 + $0x370] sm:$0xff]
        %v501 = vld [vmem:[%s286 + $0x378] sm:$0xff]
        %v502 = vld [vmem:[%s286 + $0x380] sm:$0xff]
        %v503 = vld [vmem:[%s286 + $0x388] sm:$0xff]
        %v504 = vld [vmem:[%s286 + $0x390] sm:$0xff]
        %v505 = vld [vmem:[%s286 + $0x398] sm:$0xff]
        %v506 = vld [vmem:[%s286 + $0x3a0] sm:$0xff]
        %v507 = vld [vmem:[%s286 + $0x3a8] sm:$0xff]
        %v508 = vld [vmem:[%s286 + $0x3b0] sm:$0xff]
        %v509 = vld [vmem:[%s286 + $0x3b8] sm:$0xff]
        %v510 = vld [vmem:[%s286 + $0x3c0] sm:$0xff]
        %v511 = vld [vmem:[%s286 + $0x3c8] sm:$0xff]
        %v512 = vld [vmem:[%s286 + $0x3d0] sm:$0xff]
        %v513 = vld [vmem:[%s286 + $0x3d8] sm:$0xff]
        %v514 = vld [vmem:[%s286 + $0x3e0] sm:$0xff]
        %v515 = vld [vmem:[%s286 + $0x3e8] sm:$0xff]
        %v516 = vld [vmem:[%s286 + $0x3f0] sm:$0xff]
        %v517 = vld [vmem:[%s286 + $0x3f8] sm:$0xff]
        %v518 = vld [vmem:[%s286 + $0x400] sm:$0xff]
        %v519 = vld [vmem:[%s286 + $0x408] sm:$0xff]
        %v520 = vld [vmem:[%s286 + $0x410] sm:$0xff]
        %v521 = vld [vmem:[%s286 + $0x418] sm:$0xff]
        %v522 = vld [vmem:[%s286 + $0x420] sm:$0xff]
        %v523 = vld [vmem:[%s286 + $0x428] sm:$0xff]
        %v524 = vld [vmem:[%s286 + $0x430] sm:$0xff]
        %v525 = vld [vmem:[%s286 + $0x438] sm:$0xff]
        %v526 = vld [vmem:[%s286 + $0x440] sm:$0xff]
        %v527 = vld [vmem:[%s286 + $0x448] sm:$0xff]
        %v528 = vld [vmem:[%s286 + $0x450] sm:$0xff]
        %v529 = vld [vmem:[%s286 + $0x458] sm:$0xff]
        %v530 = vld [vmem:[%s286 + $0x460] sm:$0xff]
        %v531 = vld [vmem:[%s286 + $0x468] sm:$0xff]
        %v532 = vld [vmem:[%s286 + $0x470] sm:$0xff]
        %v533 = vld [vmem:[%s286 + $0x478] sm:$0xff]
        %v534 = vld [vmem:[%s286 + $0x480] sm:$0xff]
        %v535 = vld [vmem:[%s286 + $0x488] sm:$0xff]
        %v536 = vld [vmem:[%s286 + $0x490] sm:$0xff]
        %v537 = vld [vmem:[%s286 + $0x498] sm:$0xff]
        %v538 = vld [vmem:[%s286 + $0x4a0] sm:$0xff]
        %v539 = vld [vmem:[%s286 + $0x4a8] sm:$0xff]
        %v540 = vld [vmem:[%s286 + $0x4b0] sm:$0xff]
        %v541 = vld [vmem:[%s286 + $0x4b8] sm:$0xff]
        %v542 = vld [vmem:[%s286 + $0x4c0] sm:$0xff]
        %v543 = vld [vmem:[%s286 + $0x4c8] sm:$0xff]
        %v544 = vld [vmem:[%s286 + $0x4d0] sm:$0xff]
        %v545 = vld [vmem:[%s286 + $0x4d8] sm:$0xff]
        %v546 = vld [vmem:[%s286 + $0x4e0] sm:$0xff]
        %v547 = vld [vmem:[%s286 + $0x4e8] sm:$0xff]
        %v548 = vld [vmem:[%s286 + $0x4f0] sm:$0xff]
        %v549 = vld [vmem:[%s286 + $0x4f8] sm:$0xff]
        %v550 = vld [vmem:[%s286 + $0x500] sm:$0xff]
        %v551 = vld [vmem:[%s286 + $0x508] sm:$0xff]
        %v552 = vld [vmem:[%s286 + $0x510] sm:$0xff]
        %v553 = vld [vmem:[%s286 + $0x518] sm:$0xff]
        %v554 = vld [vmem:[%s286 + $0x520] sm:$0xff]
        %v555 = vld [vmem:[%s286 + $0x528] sm:$0xff]
        %v556 = vld [vmem:[%s286 + $0x530] sm:$0xff]
        %v557 = vld [vmem:[%s286 + $0x538] sm:$0xff]
        %v558 = vld [vmem:[%s286 + $0x540] sm:$0xff]
        %v559 = vld [vmem:[%s286 + $0x548] sm:$0xff]
        %v560 = vld [vmem:[%s286 + $0x550] sm:$0xff]
        %v561 = vld [vmem:[%s286 + $0x558] sm:$0xff]
        %v562 = vld [vmem:[%s286 + $0x560] sm:$0xff]
        %v563 = vld [vmem:[%s286 + $0x568] sm:$0xff]
        %v564 = vld [vmem:[%s286 + $0x570] sm:$0xff]
        %v565 = vld [vmem:[%s286 + $0x578] sm:$0xff]
        %v566 = vld [vmem:[%s286 + $0x580] sm:$0xff]
        %v567 = vld [vmem:[%s286 + $0x588] sm:$0xff]
        %v568 = vld [vmem:[%s286 + $0x590] sm:$0xff]
        %v569 = vld [vmem:[%s286 + $0x598] sm:$0xff]
        %v570 = vld [vmem:[%s286 + $0x5a0] sm:$0xff]
        %v571 = vld [vmem:[%s286 + $0x5a8] sm:$0xff]
        %v572 = vld [vmem:[%s286 + $0x5b0] sm:$0xff]
        %v573 = vld [vmem:[%s286 + $0x5b8] sm:$0xff]
        %v574 = vld [vmem:[%s286 + $0x5c0] sm:$0xff]
        %v575 = vld [vmem:[%s286 + $0x5c8] sm:$0xff]
        %v576 = vld [vmem:[%s286 + $0x5d0] sm:$0xff]
        %v577 = vld [vmem:[%s286 + $0x5d8] sm:$0xff]
        %v578 = vld [vmem:[%s286 + $0x5e0] sm:$0xff]
        %v579 = vld [vmem:[%s286 + $0x5e8] sm:$0xff]
        %v580 = vld [vmem:[%s286 + $0x5f0] sm:$0xff]
        %v581 = vld [vmem:[%s286 + $0x5f8] sm:$0xff]
        %v582 = vld [vmem:[%s286 + $0x600] sm:$0xff]
        %v583 = vld [vmem:[%s286 + $0x608] sm:$0xff]
        %v584 = vld [vmem:[%s286 + $0x610] sm:$0xff]
        %v585 = vld [vmem:[%s286 + $0x618] sm:$0xff]
        %v586 = vld [vmem:[%s286 + $0x620] sm:$0xff]
        %v587 = vld [vmem:[%s286 + $0x628] sm:$0xff]
        %v588 = vld [vmem:[%s286 + $0x630] sm:$0xff]
        %v589 = vld [vmem:[%s286 + $0x638] sm:$0xff]
        %v590 = vld [vmem:[%s286 + $0x640] sm:$0xff]
        %v591 = vld [vmem:[%s286 + $0x648] sm:$0xff]
        %v592 = vld [vmem:[%s286 + $0x650] sm:$0xff]
        %v593 = vld [vmem:[%s286 + $0x658] sm:$0xff]
        %v594 = vld [vmem:[%s286 + $0x660] sm:$0xff]
        %v595 = vld [vmem:[%s286 + $0x668] sm:$0xff]
        %v596 = vld [vmem:[%s286 + $0x670] sm:$0xff]
        %v597 = vld [vmem:[%s286 + $0x678] sm:$0xff]
        %v598 = vld [vmem:[%s286 + $0x680] sm:$0xff]
        %v599 = vld [vmem:[%s286 + $0x688] sm:$0xff]
        %v600 = vld [vmem:[%s286 + $0x690] sm:$0xff]
        %v601 = vld [vmem:[%s286 + $0x698] sm:$0xff]
        %v602 = vld [vmem:[%s286 + $0x6a0] sm:$0xff]
        %v603 = vld [vmem:[%s286 + $0x6a8] sm:$0xff]
        %v604 = vld [vmem:[%s286 + $0x6b0] sm:$0xff]
        %v605 = vld [vmem:[%s286 + $0x6b8] sm:$0xff]
        %v606 = vld [vmem:[%s286 + $0x6c0] sm:$0xff]
        %v607 = vld [vmem:[%s286 + $0x6c8] sm:$0xff]
        %v608 = vld [vmem:[%s286 + $0x6d0] sm:$0xff]
        %v609 = vld [vmem:[%s286 + $0x6d8] sm:$0xff]
        %v610 = vld [vmem:[%s286 + $0x6e0] sm:$0xff]
        %v611 = vld [vmem:[%s286 + $0x6e8] sm:$0xff]
        %v612 = vld [vmem:[%s286 + $0x6f0] sm:$0xff]
        %v613 = vld [vmem:[%s286 + $0x6f8] sm:$0xff]
        %v614 = vld [vmem:[%s286 + $0x700] sm:$0xff]
        %v615 = vld [vmem:[%s286 + $0x708] sm:$0xff]
        %v616 = vld [vmem:[%s286 + $0x710] sm:$0xff]
        %v617 = vld [vmem:[%s286 + $0x718] sm:$0xff]
        %v618 = vld [vmem:[%s286 + $0x720] sm:$0xff]
        %v619 = vld [vmem:[%s286 + $0x728] sm:$0xff]
        %v620 = vld [vmem:[%s286 + $0x730] sm:$0xff]
        %v621 = vld [vmem:[%s286 + $0x738] sm:$0xff]
        %v622 = vld [vmem:[%s286 + $0x740] sm:$0xff]
        %v623 = vld [vmem:[%s286 + $0x748] sm:$0xff]
        %v624 = vld [vmem:[%s286 + $0x750] sm:$0xff]
        %v625 = vld [vmem:[%s286 + $0x758] sm:$0xff]
        %v626 = vld [vmem:[%s286 + $0x760] sm:$0xff]
        %v627 = vld [vmem:[%s286 + $0x768] sm:$0xff]
        %v628 = vld [vmem:[%s286 + $0x770] sm:$0xff]
        %v629 = vld [vmem:[%s286 + $0x778] sm:$0xff]
        %v630 = vld [vmem:[%s286 + $0x780] sm:$0xff]
        %v631 = vld [vmem:[%s286 + $0x788] sm:$0xff]
        %v632 = vld [vmem:[%s286 + $0x790] sm:$0xff]
        %v633 = vld [vmem:[%s286 + $0x798] sm:$0xff]
        %v634 = vld [vmem:[%s286 + $0x7a0] sm:$0xff]
        %v635 = vld [vmem:[%s286 + $0x7a8] sm:$0xff]
        %v636 = vld [vmem:[%s286 + $0x7b0] sm:$0xff]
        %v637 = vld [vmem:[%s286 + $0x7b8] sm:$0xff]
        %v638 = vld [vmem:[%s286 + $0x7c0] sm:$0xff]
        %v639 = vld [vmem:[%s286 + $0x7c8] sm:$0xff]
        %v640 = vld [vmem:[%s286 + $0x7d0] sm:$0xff]
        %v641 = vld [vmem:[%s286 + $0x7d8] sm:$0xff]
        %v642 = vld [vmem:[%s286 + $0x7e0] sm:$0xff]
        %v643 = vld [vmem:[%s286 + $0x7e8] sm:$0xff]
        %v644 = vld [vmem:[%s286 + $0x7f0] sm:$0xff]
        %v645 = vld [vmem:[%s286 + $0x7f8] sm:$0xff]
        %s646 = scalar_lea.vmem %s346, 1
        %v647 = vld [vmem:[%s646] ss:$2 sm:$0xf]
        %v649 = vlaneseq
        %v650 = vshrl.u32 %v649, 7
        %v651 = vsub.s32 0, %v650
        %v652 = vrot.slane %v647, %v651
        %v653 = vlaneseq
        %v654 = vshrl.u32 %v653, 7
        %v655 = vsub.s32 1, %v654
        %v656 = vrot.slane %v647, %v655
        %v657 = vlaneseq
        %v658 = vshrl.u32 %v657, 7
        %v659 = vsub.s32 2, %v658
        %v660 = vrot.slane %v647, %v659
        %v661 = vlaneseq
        %v662 = vshrl.u32 %v661, 7
        %v663 = vsub.s32 3, %v662
        %v664 = vrot.slane %v647, %v663
        %669 = vmatprep.subr.mxu0 %v391
        %670 = vmatpush1.msra.mxu0 %v390
        %671 = vmatprep.subr.mxu0 %v395
        %672 = vmatpush1.msra.mxu0 %v394
        %673 = vmatprep.subr.mxu0 %v399
        %674 = vmatpush1.msra.mxu0 %v398
        %675 = vmatprep.subr.mxu0 %v403
        %676 = vmatpush1.msra.mxu0 %v402
        %677 = vmatprep.subr.mxu0 %v407
        %678 = vmatpush1.msra.mxu0 %v406
        %679 = vmatprep.subr.mxu0 %v411
        %680 = vmatpush1.msra.mxu0 %v410
        %681 = vmatprep.subr.mxu0 %v415
        %682 = vmatpush1.msra.mxu0 %v414
        %683 = vmatprep.subr.mxu0 %v419
        %684 = vmatpush1.msra.mxu0 %v418
        %685 = vmatprep.subr.mxu0 %v423
        %686 = vmatpush1.msra.mxu0 %v422
        %687 = vmatprep.subr.mxu0 %v427
        %688 = vmatpush1.msra.mxu0 %v426
        %689 = vmatprep.subr.mxu0 %v431
        %690 = vmatpush1.msra.mxu0 %v430
        %691 = vmatprep.subr.mxu0 %v435
        %692 = vmatpush1.msra.mxu0 %v434
        %693 = vmatprep.subr.mxu0 %v439
        %694 = vmatpush1.msra.mxu0 %v438
        %695 = vmatprep.subr.mxu0 %v443
        %696 = vmatpush1.msra.mxu0 %v442
        %697 = vmatprep.subr.mxu0 %v447
        %698 = vmatpush1.msra.mxu0 %v446
        %699 = vmatprep.subr.mxu0 %v451
        %700 = vmatpush1.msra.mxu0 %v450
        %701 = vmatprep.subr.mxu0 %v455
        %702 = vmatpush1.msra.mxu0 %v454
        %703 = vmatprep.subr.mxu0 %v459
        %704 = vmatpush1.msra.mxu0 %v458
        %705 = vmatprep.subr.mxu0 %v463
        %706 = vmatpush1.msra.mxu0 %v462
        %707 = vmatprep.subr.mxu0 %v467
        %708 = vmatpush1.msra.mxu0 %v466
        %709 = vmatprep.subr.mxu0 %v471
        %710 = vmatpush1.msra.mxu0 %v470
        %711 = vmatprep.subr.mxu0 %v475
        %712 = vmatpush1.msra.mxu0 %v474
        %713 = vmatprep.subr.mxu0 %v479
        %714 = vmatpush1.msra.mxu0 %v478
        %715 = vmatprep.subr.mxu0 %v483
        %716 = vmatpush1.msra.mxu0 %v482
        %717 = vmatprep.subr.mxu0 %v487
        %718 = vmatpush1.msra.mxu0 %v486
        %719 = vmatprep.subr.mxu0 %v491
        %720 = vmatpush1.msra.mxu0 %v490
        %721 = vmatprep.subr.mxu0 %v495
        %722 = vmatpush1.msra.mxu0 %v494
        %723 = vmatprep.subr.mxu0 %v499
        %724 = vmatpush1.msra.mxu0 %v498
        %725 = vmatprep.subr.mxu0 %v503
        %726 = vmatpush1.msra.mxu0 %v502
        %727 = vmatprep.subr.mxu0 %v507
        %728 = vmatpush1.msra.mxu0 %v506
        %729 = vmatprep.subr.mxu0 %v511
        %730 = vmatpush1.msra.mxu0 %v510
        %731 = vmatprep.subr.mxu0 %v515
        %732 = vmatpush1.msra.mxu0 %v514
        %733 = vmatprep.mubr.f32.mxu0 %v387
        %734 = vmatmul.mubr.f32.gmra.mrb[0].mxu0 %v386
        %v735 = vpop.f32.mrb[0].mxu0
        %v736 = vadd.f32 %v652, %v735
        %v737 = vpop.f32.mrb[0].mxu0
        %v738 = vadd.f32 %v656, %v737
        %739 = vdwg.mxu0
        %740 = vmatprep.subr.mxu0 %v519
        %741 = vmatpush1.msra.mxu0 %v518
        %742 = vmatprep.subr.mxu0 %v523
        %743 = vmatpush1.msra.mxu0 %v522
        %744 = vmatprep.subr.mxu0 %v527
        %745 = vmatpush1.msra.mxu0 %v526
        %746 = vmatprep.subr.mxu0 %v531
        %747 = vmatpush1.msra.mxu0 %v530
        %748 = vmatprep.subr.mxu0 %v535
        %749 = vmatpush1.msra.mxu0 %v534
        %750 = vmatprep.subr.mxu0 %v539
        %751 = vmatpush1.msra.mxu0 %v538
        %752 = vmatprep.subr.mxu0 %v543
        %753 = vmatpush1.msra.mxu0 %v542
        %754 = vmatprep.subr.mxu0 %v547
        %755 = vmatpush1.msra.mxu0 %v546
        %756 = vmatprep.subr.mxu0 %v551
        %757 = vmatpush1.msra.mxu0 %v550
        %758 = vmatprep.subr.mxu0 %v555
        %759 = vmatpush1.msra.mxu0 %v554
        %760 = vmatprep.subr.mxu0 %v559
        %761 = vmatpush1.msra.mxu0 %v558
        %762 = vmatprep.subr.mxu0 %v563
        %763 = vmatpush1.msra.mxu0 %v562
        %764 = vmatprep.subr.mxu0 %v567
        %765 = vmatpush1.msra.mxu0 %v566
        %766 = vmatprep.subr.mxu0 %v571
        %767 = vmatpush1.msra.mxu0 %v570
        %768 = vmatprep.subr.mxu0 %v575
        %769 = vmatpush1.msra.mxu0 %v574
        %770 = vmatprep.subr.mxu0 %v579
        %771 = vmatpush1.msra.mxu0 %v578
        %772 = vmatprep.subr.mxu0 %v583
        %773 = vmatpush1.msra.mxu0 %v582
        %774 = vmatprep.subr.mxu0 %v587
        %775 = vmatpush1.msra.mxu0 %v586
        %776 = vmatprep.subr.mxu0 %v591
        %777 = vmatpush1.msra.mxu0 %v590
        %778 = vmatprep.subr.mxu0 %v595
        %779 = vmatpush1.msra.mxu0 %v594
        %780 = vmatprep.subr.mxu0 %v599
        %781 = vmatpush1.msra.mxu0 %v598
        %782 = vmatprep.subr.mxu0 %v603
        %783 = vmatpush1.msra.mxu0 %v602
        %784 = vmatprep.subr.mxu0 %v607
        %785 = vmatpush1.msra.mxu0 %v606
        %786 = vmatprep.subr.mxu0 %v611
        %787 = vmatpush1.msra.mxu0 %v610
        %788 = vmatprep.subr.mxu0 %v615
        %789 = vmatpush1.msra.mxu0 %v614
        %790 = vmatprep.subr.mxu0 %v619
        %791 = vmatpush1.msra.mxu0 %v618
        %792 = vmatprep.subr.mxu0 %v623
        %793 = vmatpush1.msra.mxu0 %v622
        %794 = vmatprep.subr.mxu0 %v627
        %795 = vmatpush1.msra.mxu0 %v626
        %796 = vmatprep.subr.mxu0 %v631
        %797 = vmatpush1.msra.mxu0 %v630
        %798 = vmatprep.subr.mxu0 %v635
        %799 = vmatpush1.msra.mxu0 %v634
        %800 = vmatprep.subr.mxu0 %v639
        %801 = vmatpush1.msra.mxu0 %v638
        %802 = vmatprep.subr.mxu0 %v643
        %803 = vmatpush1.msra.mxu0 %v642
        %804 = vmatprep.mubr.f32.mxu0 %v389
        %805 = vmatmul.mubr.f32.gmra.mrb[0].mxu0 %v388
        %v806 = vpop.f32.mrb[0].mxu0
        %v807 = vadd.f32 %v736, %v806
        %v808 = vpop.f32.mrb[0].mxu0
        %v809 = vadd.f32 %v738, %v808
        %810 = vdwg.mxu0
        %811 = vmatprep.subr.mxu0 %v393
        %812 = vmatpush1.msra.mxu0 %v392
        %813 = vmatprep.subr.mxu0 %v397
        %814 = vmatpush1.msra.mxu0 %v396
        %815 = vmatprep.subr.mxu0 %v401
        %816 = vmatpush1.msra.mxu0 %v400
        %817 = vmatprep.subr.mxu0 %v405
        %818 = vmatpush1.msra.mxu0 %v404
        %819 = vmatprep.subr.mxu0 %v409
        %820 = vmatpush1.msra.mxu0 %v408
        %821 = vmatprep.subr.mxu0 %v413
        %822 = vmatpush1.msra.mxu0 %v412
        %823 = vmatprep.subr.mxu0 %v417
        %824 = vmatpush1.msra.mxu0 %v416
        %825 = vmatprep.subr.mxu0 %v421
        %826 = vmatpush1.msra.mxu0 %v420
        %827 = vmatprep.subr.mxu0 %v425
        %828 = vmatpush1.msra.mxu0 %v424
        %829 = vmatprep.subr.mxu0 %v429
        %830 = vmatpush1.msra.mxu0 %v428
        %831 = vmatprep.subr.mxu0 %v433
        %832 = vmatpush1.msra.mxu0 %v432
        %833 = vmatprep.subr.mxu0 %v437
        %834 = vmatpush1.msra.mxu0 %v436
        %835 = vmatprep.subr.mxu0 %v441
        %836 = vmatpush1.msra.mxu0 %v440
        %837 = vmatprep.subr.mxu0 %v445
        %838 = vmatpush1.msra.mxu0 %v444
        %839 = vmatprep.subr.mxu0 %v449
        %840 = vmatpush1.msra.mxu0 %v448
        %841 = vmatprep.subr.mxu0 %v453
        %842 = vmatpush1.msra.mxu0 %v452
        %843 = vmatprep.subr.mxu0 %v457
        %844 = vmatpush1.msra.mxu0 %v456
        %845 = vmatprep.subr.mxu0 %v461
        %846 = vmatpush1.msra.mxu0 %v460
        %847 = vmatprep.subr.mxu0 %v465
        %848 = vmatpush1.msra.mxu0 %v464
        %849 = vmatprep.subr.mxu0 %v469
        %850 = vmatpush1.msra.mxu0 %v468
        %851 = vmatprep.subr.mxu0 %v473
        %852 = vmatpush1.msra.mxu0 %v472
        %853 = vmatprep.subr.mxu0 %v477
        %854 = vmatpush1.msra.mxu0 %v476
        %855 = vmatprep.subr.mxu0 %v481
        %856 = vmatpush1.msra.mxu0 %v480
        %857 = vmatprep.subr.mxu0 %v485
        %858 = vmatpush1.msra.mxu0 %v484
        %859 = vmatprep.subr.mxu0 %v489
        %860 = vmatpush1.msra.mxu0 %v488
        %861 = vmatprep.subr.mxu0 %v493
        %862 = vmatpush1.msra.mxu0 %v492
        %863 = vmatprep.subr.mxu0 %v497
        %864 = vmatpush1.msra.mxu0 %v496
        %865 = vmatprep.subr.mxu0 %v501
        %866 = vmatpush1.msra.mxu0 %v500
        %867 = vmatprep.subr.mxu0 %v505
        %868 = vmatpush1.msra.mxu0 %v504
        %869 = vmatprep.subr.mxu0 %v509
        %870 = vmatpush1.msra.mxu0 %v508
        %871 = vmatprep.subr.mxu0 %v513
        %872 = vmatpush1.msra.mxu0 %v512
        %873 = vmatprep.subr.mxu0 %v517
        %874 = vmatpush1.msra.mxu0 %v516
        %875 = vmatprep.mubr.f32.mxu0 %v387
        %876 = vmatmul.mubr.f32.gmra.mrb[0].mxu0 %v386
        %v877 = vpop.f32.mrb[0].mxu0
        %v878 = vadd.f32 %v660, %v877
        %v879 = vpop.f32.mrb[0].mxu0
        %v880 = vadd.f32 %v664, %v879
        %881 = vdwg.mxu0
        %882 = vmatprep.subr.mxu0 %v521
        %883 = vmatpush1.msra.mxu0 %v520
        %884 = vmatprep.subr.mxu0 %v525
        %885 = vmatpush1.msra.mxu0 %v524
        %886 = vmatprep.subr.mxu0 %v529
        %887 = vmatpush1.msra.mxu0 %v528
        %888 = vmatprep.subr.mxu0 %v533
        %889 = vmatpush1.msra.mxu0 %v532
        %890 = vmatprep.subr.mxu0 %v537
        %891 = vmatpush1.msra.mxu0 %v536
        %892 = vmatprep.subr.mxu0 %v541
        %893 = vmatpush1.msra.mxu0 %v540
        %894 = vmatprep.subr.mxu0 %v545
        %895 = vmatpush1.msra.mxu0 %v544
        %896 = vmatprep.subr.mxu0 %v549
        %897 = vmatpush1.msra.mxu0 %v548
        %898 = vmatprep.subr.mxu0 %v553
        %899 = vmatpush1.msra.mxu0 %v552
        %900 = vmatprep.subr.mxu0 %v557
        %901 = vmatpush1.msra.mxu0 %v556
        %902 = vmatprep.subr.mxu0 %v561
        %903 = vmatpush1.msra.mxu0 %v560
        %904 = vmatprep.subr.mxu0 %v565
        %905 = vmatpush1.msra.mxu0 %v564
        %906 = vmatprep.subr.mxu0 %v569
        %907 = vmatpush1.msra.mxu0 %v568
        %908 = vmatprep.subr.mxu0 %v573
        %909 = vmatpush1.msra.mxu0 %v572
        %910 = vmatprep.subr.mxu0 %v577
        %911 = vmatpush1.msra.mxu0 %v576
        %912 = vmatprep.subr.mxu0 %v581
        %913 = vmatpush1.msra.mxu0 %v580
        %914 = vmatprep.subr.mxu0 %v585
        %915 = vmatpush1.msra.mxu0 %v584
        %916 = vmatprep.subr.mxu0 %v589
        %917 = vmatpush1.msra.mxu0 %v588
        %918 = vmatprep.subr.mxu0 %v593
        %919 = vmatpush1.msra.mxu0 %v592
        %920 = vmatprep.subr.mxu0 %v597
        %921 = vmatpush1.msra.mxu0 %v596
        %922 = vmatprep.subr.mxu0 %v601
        %923 = vmatpush1.msra.mxu0 %v600
        %924 = vmatprep.subr.mxu0 %v605
        %925 = vmatpush1.msra.mxu0 %v604
        %926 = vmatprep.subr.mxu0 %v609
        %927 = vmatpush1.msra.mxu0 %v608
        %928 = vmatprep.subr.mxu0 %v613
        %929 = vmatpush1.msra.mxu0 %v612
        %930 = vmatprep.subr.mxu0 %v617
        %931 = vmatpush1.msra.mxu0 %v616
        %932 = vmatprep.subr.mxu0 %v621
        %933 = vmatpush1.msra.mxu0 %v620
        %934 = vmatprep.subr.mxu0 %v625
        %935 = vmatpush1.msra.mxu0 %v624
        %936 = vmatprep.subr.mxu0 %v629
        %937 = vmatpush1.msra.mxu0 %v628
        %938 = vmatprep.subr.mxu0 %v633
        %939 = vmatpush1.msra.mxu0 %v632
        %940 = vmatprep.subr.mxu0 %v637
        %941 = vmatpush1.msra.mxu0 %v636
        %942 = vmatprep.subr.mxu0 %v641
        %943 = vmatpush1.msra.mxu0 %v640
        %944 = vmatprep.subr.mxu0 %v645
        %945 = vmatpush1.msra.mxu0 %v644
        %946 = vmatprep.mubr.f32.mxu0 %v389
        %947 = vmatmul.mubr.f32.gmra.mrb[0].mxu0 %v388
        %v948 = vpop.f32.mrb[0].mxu0
        %v949 = vadd.f32 %v878, %v948
        %v950 = vpop.f32.mrb[0].mxu0
        %v951 = vadd.f32 %v880, %v950
        %952 = vdwg.mxu0
        %v953 = vtanh.pop %v807
        %v954 = vtanh.pop %v809
        %v955 = vtanh.pop %v949
        %v956 = vtanh.pop %v951
        %957 = vst [vmem:[%s355] sm:$0xff] %v953
        %958 = vst [vmem:[%s355 + $0x8] sm:$0xff] %v954
        %959 = vst [vmem:[%s355 + $0x10] sm:$0xff] %v955
        %960 = vst [vmem:[%s355 + $0x18] sm:$0xff] %v956
        %v961 = vld [vmem:[%s295] sm:$0xff]
        %v962 = vld [vmem:[%s295 + $0x8] sm:$0xff]
        %v963 = vld [vmem:[%s295 + $0x10] sm:$0xff]
        %v964 = vld [vmem:[%s295 + $0x18] sm:$0xff]
        %v965 = vld [vmem:[%s295 + $0x20] sm:$0xff]
        %v966 = vld [vmem:[%s295 + $0x28] sm:$0xff]
        %v967 = vld [vmem:[%s295 + $0x30] sm:$0xff]
        %v968 = vld [vmem:[%s295 + $0x38] sm:$0xff]
        %v969 = vld [vmem:[%s295 + $0x40] sm:$0xff]
        %v970 = vld [vmem:[%s295 + $0x48] sm:$0xff]
        %v971 = vld [vmem:[%s295 + $0x50] sm:$0xff]
        %v972 = vld [vmem:[%s295 + $0x58] sm:$0xff]
        %v973 = vld [vmem:[%s295 + $0x60] sm:$0xff]
        %v974 = vld [vmem:[%s295 + $0x68] sm:$0xff]
        %v975 = vld [vmem:[%s295 + $0x70] sm:$0xff]
        %v976 = vld [vmem:[%s295 + $0x78] sm:$0xff]
        %v977 = vld [vmem:[%s295 + $0x80] sm:$0xff]
        %v978 = vld [vmem:[%s295 + $0x88] sm:$0xff]
        %v979 = vld [vmem:[%s295 + $0x90] sm:$0xff]
        %v980 = vld [vmem:[%s295 + $0x98] sm:$0xff]
        %v981 = vld [vmem:[%s295 + $0xa0] sm:$0xff]
        %v982 = vld [vmem:[%s295 + $0xa8] sm:$0xff]
        %v983 = vld [vmem:[%s295 + $0xb0] sm:$0xff]
        %v984 = vld [vmem:[%s295 + $0xb8] sm:$0xff]
        %v985 = vld [vmem:[%s295 + $0xc0] sm:$0xff]
        %v986 = vld [vmem:[%s295 + $0xc8] sm:$0xff]
        %v987 = vld [vmem:[%s295 + $0xd0] sm:$0xff]
        %v988 = vld [vmem:[%s295 + $0xd8] sm:$0xff]
        %v989 = vld [vmem:[%s295 + $0xe0] sm:$0xff]
        %v990 = vld [vmem:[%s295 + $0xe8] sm:$0xff]
        %v991 = vld [vmem:[%s295 + $0xf0] sm:$0xff]
        %v992 = vld [vmem:[%s295 + $0xf8] sm:$0xff]
        %v993 = vld [vmem:[%s295 + $0x100] sm:$0xff]
        %v994 = vld [vmem:[%s295 + $0x108] sm:$0xff]
        %v995 = vld [vmem:[%s295 + $0x110] sm:$0xff]
        %v996 = vld [vmem:[%s295 + $0x118] sm:$0xff]
        %v997 = vld [vmem:[%s295 + $0x120] sm:$0xff]
        %v998 = vld [vmem:[%s295 + $0x128] sm:$0xff]
        %v999 = vld [vmem:[%s295 + $0x130] sm:$0xff]
        %v1000 = vld [vmem:[%s295 + $0x138] sm:$0xff]
        %v1001 = vld [vmem:[%s295 + $0x140] sm:$0xff]
        %v1002 = vld [vmem:[%s295 + $0x148] sm:$0xff]
        %v1003 = vld [vmem:[%s295 + $0x150] sm:$0xff]
        %v1004 = vld [vmem:[%s295 + $0x158] sm:$0xff]
        %v1005 = vld [vmem:[%s295 + $0x160] sm:$0xff]
        %v1006 = vld [vmem:[%s295 + $0x168] sm:$0xff]
        %v1007 = vld [vmem:[%s295 + $0x170] sm:$0xff]
        %v1008 = vld [vmem:[%s295 + $0x178] sm:$0xff]
        %v1009 = vld [vmem:[%s295 + $0x180] sm:$0xff]
        %v1010 = vld [vmem:[%s295 + $0x188] sm:$0xff]
        %v1011 = vld [vmem:[%s295 + $0x190] sm:$0xff]
        %v1012 = vld [vmem:[%s295 + $0x198] sm:$0xff]
        %v1013 = vld [vmem:[%s295 + $0x1a0] sm:$0xff]
        %v1014 = vld [vmem:[%s295 + $0x1a8] sm:$0xff]
        %v1015 = vld [vmem:[%s295 + $0x1b0] sm:$0xff]
        %v1016 = vld [vmem:[%s295 + $0x1b8] sm:$0xff]
        %v1017 = vld [vmem:[%s295 + $0x1c0] sm:$0xff]
        %v1018 = vld [vmem:[%s295 + $0x1c8] sm:$0xff]
        %v1019 = vld [vmem:[%s295 + $0x1d0] sm:$0xff]
        %v1020 = vld [vmem:[%s295 + $0x1d8] sm:$0xff]
        %v1021 = vld [vmem:[%s295 + $0x1e0] sm:$0xff]
        %v1022 = vld [vmem:[%s295 + $0x1e8] sm:$0xff]
        %v1023 = vld [vmem:[%s295 + $0x1f0] sm:$0xff]
        %v1024 = vld [vmem:[%s295 + $0x1f8] sm:$0xff]
        %1025 = vmatprep.subr.mxu0 0.0
        %1026 = vmatpush1.msra.mxu0 %v961
        %1027 = vmatprep.subr.mxu0 0.0
        %1028 = vmatpush1.msra.mxu0 %v962
        %1029 = vmatprep.subr.mxu0 0.0
        %1030 = vmatpush1.msra.mxu0 %v963
        %1031 = vmatprep.subr.mxu0 0.0
        %1032 = vmatpush1.msra.mxu0 %v964
        %1033 = vmatprep.subr.mxu0 0.0
        %1034 = vmatpush1.msra.mxu0 %v965
        %1035 = vmatprep.subr.mxu0 0.0
        %1036 = vmatpush1.msra.mxu0 %v966
        %1037 = vmatprep.subr.mxu0 0.0
        %1038 = vmatpush1.msra.mxu0 %v967
        %1039 = vmatprep.subr.mxu0 0.0
        %1040 = vmatpush1.msra.mxu0 %v968
        %1041 = vmatprep.subr.mxu0 0.0
        %1042 = vmatpush1.msra.mxu0 %v969
        %1043 = vmatprep.subr.mxu0 0.0
        %1044 = vmatpush1.msra.mxu0 %v970
        %1045 = vmatprep.subr.mxu0 0.0
        %1046 = vmatpush1.msra.mxu0 %v971
        %1047 = vmatprep.subr.mxu0 0.0
        %1048 = vmatpush1.msra.mxu0 %v972
        %1049 = vmatprep.subr.mxu0 0.0
        %1050 = vmatpush1.msra.mxu0 %v973
        %1051 = vmatprep.subr.mxu0 0.0
        %1052 = vmatpush1.msra.mxu0 %v974
        %1053 = vmatprep.subr.mxu0 0.0
        %1054 = vmatpush1.msra.mxu0 %v975
        %1055 = vmatprep.subr.mxu0 0.0
        %1056 = vmatpush1.msra.mxu0 %v976
        %1057 = vmatprep.subr.mxu0 0.0
        %1058 = vmatpush1.msra.mxu0 %v977
        %1059 = vmatprep.subr.mxu0 0.0
        %1060 = vmatpush1.msra.mxu0 %v978
        %1061 = vmatprep.subr.mxu0 0.0
        %1062 = vmatpush1.msra.mxu0 %v979
        %1063 = vmatprep.subr.mxu0 0.0
        %1064 = vmatpush1.msra.mxu0 %v980
        %1065 = vmatprep.subr.mxu0 0.0
        %1066 = vmatpush1.msra.mxu0 %v981
        %1067 = vmatprep.subr.mxu0 0.0
        %1068 = vmatpush1.msra.mxu0 %v982
        %1069 = vmatprep.subr.mxu0 0.0
        %1070 = vmatpush1.msra.mxu0 %v983
        %1071 = vmatprep.subr.mxu0 0.0
        %1072 = vmatpush1.msra.mxu0 %v984
        %1073 = vmatprep.subr.mxu0 0.0
        %1074 = vmatpush1.msra.mxu0 %v985
        %1075 = vmatprep.subr.mxu0 0.0
        %1076 = vmatpush1.msra.mxu0 %v986
        %1077 = vmatprep.subr.mxu0 0.0
        %1078 = vmatpush1.msra.mxu0 %v987
        %1079 = vmatprep.subr.mxu0 0.0
        %1080 = vmatpush1.msra.mxu0 %v988
        %1081 = vmatprep.subr.mxu0 0.0
        %1082 = vmatpush1.msra.mxu0 %v989
        %1083 = vmatprep.subr.mxu0 0.0
        %1084 = vmatpush1.msra.mxu0 %v990
        %1085 = vmatprep.subr.mxu0 0.0
        %1086 = vmatpush1.msra.mxu0 %v991
        %1087 = vmatprep.subr.mxu0 0.0
        %1088 = vmatpush1.msra.mxu0 %v992
        %1089 = vmatprep.mubr.f32.mxu0 %v954
        %1090 = vmatmul.mubr.f32.gmra.mrb[0].mxu0 %v953
        %v1091 = vpop.f32.mrb[0].mxu0
        %v1092 = vadd.f32 0.0, %v1091
        %v1093 = vpop.f32.mrb[0].mxu0
        %1094 = vdwg.mxu0
        %1095 = vmatprep.subr.mxu0 0.0
        %1096 = vmatpush1.msra.mxu0 %v993
        %1097 = vmatprep.subr.mxu0 0.0
        %1098 = vmatpush1.msra.mxu0 %v994
        %1099 = vmatprep.subr.mxu0 0.0
        %1100 = vmatpush1.msra.mxu0 %v995
        %1101 = vmatprep.subr.mxu0 0.0
        %1102 = vmatpush1.msra.mxu0 %v996
        %1103 = vmatprep.subr.mxu0 0.0
        %1104 = vmatpush1.msra.mxu0 %v997
        %1105 = vmatprep.subr.mxu0 0.0
        %1106 = vmatpush1.msra.mxu0 %v998
        %1107 = vmatprep.subr.mxu0 0.0
        %1108 = vmatpush1.msra.mxu0 %v999
        %1109 = vmatprep.subr.mxu0 0.0
        %1110 = vmatpush1.msra.mxu0 %v1000
        %1111 = vmatprep.subr.mxu0 0.0
        %1112 = vmatpush1.msra.mxu0 %v1001
        %1113 = vmatprep.subr.mxu0 0.0
        %1114 = vmatpush1.msra.mxu0 %v1002
        %1115 = vmatprep.subr.mxu0 0.0
        %1116 = vmatpush1.msra.mxu0 %v1003
        %1117 = vmatprep.subr.mxu0 0.0
        %1118 = vmatpush1.msra.mxu0 %v1004
        %1119 = vmatprep.subr.mxu0 0.0
        %1120 = vmatpush1.msra.mxu0 %v1005
        %1121 = vmatprep.subr.mxu0 0.0
        %1122 = vmatpush1.msra.mxu0 %v1006
        %1123 = vmatprep.subr.mxu0 0.0
        %1124 = vmatpush1.msra.mxu0 %v1007
        %1125 = vmatprep.subr.mxu0 0.0
        %1126 = vmatpush1.msra.mxu0 %v1008
        %1127 = vmatprep.subr.mxu0 0.0
        %1128 = vmatpush1.msra.mxu0 %v1009
        %1129 = vmatprep.subr.mxu0 0.0
        %1130 = vmatpush1.msra.mxu0 %v1010
        %1131 = vmatprep.subr.mxu0 0.0
        %1132 = vmatpush1.msra.mxu0 %v1011
        %1133 = vmatprep.subr.mxu0 0.0
        %1134 = vmatpush1.msra.mxu0 %v1012
        %1135 = vmatprep.subr.mxu0 0.0
        %1136 = vmatpush1.msra.mxu0 %v1013
        %1137 = vmatprep.subr.mxu0 0.0
        %1138 = vmatpush1.msra.mxu0 %v1014
        %1139 = vmatprep.subr.mxu0 0.0
        %1140 = vmatpush1.msra.mxu0 %v1015
        %1141 = vmatprep.subr.mxu0 0.0
        %1142 = vmatpush1.msra.mxu0 %v1016
        %1143 = vmatprep.subr.mxu0 0.0
        %1144 = vmatpush1.msra.mxu0 %v1017
        %1145 = vmatprep.subr.mxu0 0.0
        %1146 = vmatpush1.msra.mxu0 %v1018
        %1147 = vmatprep.subr.mxu0 0.0
        %1148 = vmatpush1.msra.mxu0 %v1019
        %1149 = vmatprep.subr.mxu0 0.0
        %1150 = vmatpush1.msra.mxu0 %v1020
        %1151 = vmatprep.subr.mxu0 0.0
        %1152 = vmatpush1.msra.mxu0 %v1021
        %1153 = vmatprep.subr.mxu0 0.0
        %1154 = vmatpush1.msra.mxu0 %v1022
        %1155 = vmatprep.subr.mxu0 0.0
        %1156 = vmatpush1.msra.mxu0 %v1023
        %1157 = vmatprep.subr.mxu0 0.0
        %1158 = vmatpush1.msra.mxu0 %v1024
        %1159 = vmatprep.mubr.f32.mxu0 %v956
        %1160 = vmatmul.mubr.f32.gmra.mrb[0].mxu0 %v955
        %v1161 = vpop.f32.mrb[0].mxu0
        %v1162 = vadd.f32 %v1092, %v1161
        %v1163 = vpop.f32.mrb[0].mxu0
        %1164 = vdwg.mxu0
        %1165 = vst [vmem:[%s359] sm:$0xff] %v1162
        %v1166 = vld [vmem:[%s359] sm:$0xff]
        %v1167 = vld [vmem:[%s350] sm:$0x1]
        %v1168 = vlaneseq
        %v1169 = vshrl.u32 %v1168, 7
        %v1170 = vsub.s32 0, %v1169
        %v1171 = vrot.slane %v1167, %v1170
        %v1172 = vadd.f32 %v1166, %v1171
        %v1173 = vxor.u32 %v1172, 2147483648
        %v1174 = vmul.f32 %v1173, 1.442695
        %v1175 = vpow.pop %v1174
        %v1176 = vadd.f32 %v1175, 1.0
        %v1177 = vrcp.pop %v1176
        %v1178 = vmul.f32 1.0, %v1177
        %v1179 = vtanh.pop %v1166
        %v1180 = vmul.f32 %v1179, 0.5
        %v1181 = vadd.f32 %v1180, 1.0
        %1183 = vrot.lane.b32.xlu0 %v1181, 112
        %v1184 = vpop.permute.xlu0 %1183
        %v1186 = vmul.f32 %v1178, %v1184
        %v1187 = vld [vmem:[%s350 + $0x1] sm:$0x1]
        %v1188 = vlaneseq
        %v1189 = vshrl.u32 %v1188, 7
        %v1190 = vsub.s32 0, %v1189
        %v1191 = vrot.slane %v1187, %v1190
        %v1192 = vmul.f32 %v1186, %v1191
        %vm1193 = vcmask 130048
        %1194 = vst.msk [vmem:[%s359] sm:$0xff] %vm1193, %v1178
        %vm1195 = vcmask 261248
        %1196 = vst.msk [vmem:[%s359] sm:$0xff] %vm1195, %v1179
        %1198 = vrot.lane.b32.xlu0 %v1192, 32
        %v1199 = vpop.permute.xlu0 %1198
        %vm1201 = vcmask 392448
        %1202 = vst.msk [vmem:[%s359] sm:$0xff] %vm1201, %v1199
        %p1203 = scmp.lt.s32.totalorder %s24, 1
        %s1204 = scalar_select %p1203, %s24, 1
        %s1205 = smul.addr %s1204, 4
        %s1206 = smul.addr %s1205, 8
        %s1207 = scalar_lea.vmem %s5, %s1206
        %p1208 = scmp.lt.s32.totalorder %s24, 1
        %s1209 = scalar_select %p1208, %s24, 1
        %s1210 = smul.addr %s1209, 8
        %s1211 = scalar_lea.vmem %s6, %s1210
        // Predicated region
        $region49: #{hypercube_forward.1} parent=39 // pred_check
          %p1212 = pneg %p167
        $region50: #{hypercube_forward.1} parent=39 // pred_check_branch
          %1214 = sbr.rel (%p1212) target = $region52
        $region51: #{hypercube_forward.1} parent=39 // pred_region
          _
        $region52: #{hypercube_forward.1} parent=39 // pred_fallthru
          _
        // Predicated region
        $region53: #{hypercube_forward.1} parent=39 // pred_check
          %p1215 = pneg %p193
        $region54: #{hypercube_forward.1} parent=39 // pred_check_branch
          %1217 = sbr.rel (%p1215) target = $region56
        $region55: #{hypercube_forward.1} parent=39 // pred_region
          _
        $region56: #{hypercube_forward.1} parent=39 // pred_fallthru
          _
      $region40: #{hypercube_forward.1} parent=5 // pred_fallthru
        _
      %p1218 = scmp.le.s32.totalorder 2, %s19
      // Predicated region
      $region57: #{hypercube_forward.1} parent=5 // pred_check
        %p1219 = pneg %p1218
      $region58: #{hypercube_forward.1} parent=5 // pred_check_branch
        %1221 = sbr.rel (%p1219) target = $region60
      $region59: #{hypercube_forward.1} parent=5 // pred_region
        %s1222 = ssub.s32 %s19, 2
        // Predicated region
        $region61: #{hypercube_forward.1} parent=59 // pred_check
          %p1223 = pneg %p173
        $region62: #{hypercube_forward.1} parent=59 // pred_check_branch
          %1225 = sbr.rel (%p1223) target = $region64
        $region63: #{hypercube_forward.1} parent=59 // pred_region
          %p1226 = scmp.lt.s32.totalorder %s25, 1
          %s1227 = scalar_select %p1226, %s25, 1
          %s1228 = smul.addr %s1227, 4
          %s1229 = smul.addr %s1228, 8
          %s1230 = scalar_lea.vmem %s5, %s1229
        $region64: #{hypercube_forward.1} parent=59 // pred_fallthru
          _
        // Predicated region
        $region65: #{hypercube_forward.1} parent=59 // pred_check
          %p1231 = pneg %p199
        $region66: #{hypercube_forward.1} parent=59 // pred_check_branch
          %1233 = sbr.rel (%p1231) target = $region68
        $region67: #{hypercube_forward.1} parent=59 // pred_region
          %p1234 = scmp.lt.s32.totalorder %s25, 1
          %s1235 = scalar_select %p1234, %s25, 1
          %s1236 = smul.addr %s1235, 8
          %s1237 = scalar_lea.vmem %s6, %s1236
        $region68: #{hypercube_forward.1} parent=59 // pred_fallthru
          _
      $region60: #{hypercube_forward.1} parent=5 // pred_fallthru
        _
    $region6: #{hypercube_forward.1} parent=1 // loop_footer
      %s23 = sadd.s32 1, %s19
    $region7: #{hypercube_forward.1} parent=1 // loop_footer_branch
      %18 = sbr.rel target = $region3
    $region8: #{hypercube_forward.1} parent=1 // loop_exit
      _
    %1238 = vsyncpa [#allocation3], 1
    %s1239 = scalar_lea.sflag [#allocation3], 1
    %1240 = vsyncpa %s1239, 1
    %1241 = vsyncpa [#allocation5], 1
    %s1242 = scalar_lea.sflag [#allocation5], 1
    %1243 = vsyncpa %s1242, 1

</llo_original>
